<compile_context>
chip_gen: v5e
topology: v5e:2x2
jax: 0.10.0
libtpu: 0.0.40
codegen_flags: <defaults>
</compile_context>

<pallas_src>
import math

import jax
import jax.numpy as jnp
from jax.experimental import pallas as pl
from jax.experimental.pallas import tpu as pltpu

TWO_PI = 2.0 * math.pi
INV_TWO_PI = 1.0 / TWO_PI
LANES = 128


def _normalize_angle(ang):
    # ang - floor(ang / 2pi) * 2pi, divide replaced by a constant multiply.
    return ang - jnp.floor(ang * INV_TWO_PI) * TWO_PI


def _earth_kernel(p_ref, x_ref, ra_ref, dec_ref):
    # Scalar parameters from SMEM.  p_ref[2] holds exp(-e0 - 3.0), hoisted to
    # the wrapper.
    M0 = p_ref[0]
    dm = p_ref[1]
    e0nneg = p_ref[2]
    w0 = p_ref[3]
    ecl0 = p_ref[4]
    a0 = p_ref[5]
    de = p_ref[6]
    da = p_ref[7]
    dw = p_ref[8]
    decl = p_ref[9]

    x = x_ref[...]  # (tile_rows, 128) f32 — full vreg sublane/lane utilization

    M = _normalize_angle(M0 + dm * x)
    e = e0nneg + de * x
    a = a0 + da * x
    w = _normalize_angle(w0 + dw * x)

    # Kepler equation: initial guess + 3 Newton iterations (matches reference).
    # The divide is replaced by an EUP approximate reciprocal: the quotient is
    # a correction term that converges to zero and e ~ exp(-3), so the approx
    # error is far below the f32/1e-4 tolerance while freeing VALU cycles.
    E = M + e * jnp.sin(M) * (1.0 + e * jnp.cos(M))
    for _ in range(3):
        num = E - e * jnp.sin(E) - M
        den = 1.0 - e * jnp.cos(E)
        E = E - num * pl.reciprocal(den, approx=True)

    xv = a * (jnp.cos(E) - e)
    yv = a * (jnp.sqrt(1.0 - e * e) * jnp.sin(E))
    v = a * jnp.arctan2(yv, xv)   # preserved verbatim from the reference
    r = jnp.sqrt(xv * xv + yv * yv)

    lonsun = v + w
    xs = r * jnp.cos(lonsun)
    ys = r * jnp.sin(lonsun)

    obliq = ecl0 + decl * x
    ye = ys * jnp.cos(obliq)
    ze = ys * jnp.sin(obliq)

    # arctan2 returns values in (-pi, pi]; a single cheap select replaces the
    # floor/div normalization (identical result for this range).
    ra = jnp.arctan2(ye, xs)
    ra = jnp.where(ra < 0.0, ra + TWO_PI, ra)
    dec = jnp.arctan2(ze, jnp.sqrt(xs * xs + ye * ye))
    dec = jnp.where(dec < 0.0, dec + TWO_PI, dec)

    ra_ref[...] = ra
    dec_ref[...] = dec


def _round_up(v, m):
    return ((v + m - 1) // m) * m


def parameter_recovery_forward(x, params, *, max_tile_rows=512):
    """x: (N,) times.  params: (10,) scalar parameters
    [M0, dm, e0, w0, ecl0, a0, de, da, dw, decl].
    Returns (N, 2) array with columns (RA, Dec)."""
    n = x.shape[0]

    # Rows of 128 lanes, padded to a multiple of 8 sublanes.
    rows_needed = _round_up(max(8, -(-n // LANES)), 8)

    if rows_needed <= max_tile_rows:
        # Small-N path: still split into 2 tiles so the parallel grid axis
        # shards across both TensorCores on v7x (harmless on v5e/v6e).
        tile_rows = max(8, _round_up(-(-rows_needed // 2), 8))
        grid = 2
    else:
        tile_rows = max_tile_rows
        grid = -(-rows_needed // max_tile_rows)
    total_rows = tile_rows * grid
    npad = total_rows * LANES

    # Pad + reshape to the lane-dense slab (fuseable pad, no scatter).
    x2d = jnp.pad(x.astype(jnp.float32), (0, npad - n)).reshape(total_rows, LANES)

    # Hoist scalar-only preprocessing: replace e0 with exp(-e0 - 3.0).
    p = params.astype(jnp.float32)
    p = p.at[2].set(jnp.exp(-p[2] - 3.0))

    ra2d, dec2d = pl.pallas_call(
        _earth_kernel,
        out_shape=(
            jax.ShapeDtypeStruct((total_rows, LANES), jnp.float32),
            jax.ShapeDtypeStruct((total_rows, LANES), jnp.float32),
        ),
        grid=(grid,),
        in_specs=[
            pl.BlockSpec(memory_space=pltpu.MemorySpace.SMEM),     # params (10,)
            pl.BlockSpec((tile_rows, LANES), lambda i: (i, 0)),    # x tile
        ],
        out_specs=(
            pl.BlockSpec((tile_rows, LANES), lambda i: (i, 0)),    # RA tile
            pl.BlockSpec((tile_rows, LANES), lambda i: (i, 0)),    # Dec tile
        ),
        compiler_params=pltpu.CompilerParams(
            dimension_semantics=("parallel",)),
    )(p, x2d)

    # NOTE: the (N, 2) interleave below is purely to match the PyTorch module
    # API (torch.hstack).  Callers that can consume (RA, Dec) separately
    # should take ra/dec directly and skip this relayout.
    ra = ra2d.reshape(-1)[:n]
    dec = dec2d.reshape(-1)[:n]
    return jnp.stack([ra, dec], axis=1)  # (N, 2): column 0 = RA, column 1 = Dec


def _reference_forward(x, params):
    """Pure-JAX reference reproducing the PyTorch forward (float32)."""
    M0, dm, e0, w0, ecl0, a0, de, da, dw, decl = [params[i] for i in range(10)]
    x = x.reshape(-1, 1).astype(jnp.float32)
    e0nneg = jnp.exp(-e0 - 3.0)

    def norm(ang):
        return ang - jnp.floor(ang / TWO_PI) * TWO_PI

    M = norm(M0 + dm * x)
    e = e0nneg + de * x
    a = a0 + da * x
    w = norm(w0 + dw * x)
    E = M + e * jnp.sin(M) * (1.0 + e * jnp.cos(M))
    E1 = E - (E - e * jnp.sin(E) - M) / (1.0 - e * jnp.cos(E))
    E2 = E1 - (E1 - e * jnp.sin(E1) - M) / (1.0 - e * jnp.cos(E1))
    E3 = E2 - (E2 - e * jnp.sin(E2) - M) / (1.0 - e * jnp.cos(E2))
    xv = a * (jnp.cos(E3) - e)
    yv = a * (jnp.sqrt(1.0 - e ** 2) * jnp.sin(E3))
    v = a * jnp.arctan2(yv, xv)
    r = jnp.sqrt(xv ** 2 + yv ** 2)
    lonsun = v + w
    xs = r * jnp.cos(lonsun)
    ys = r * jnp.sin(lonsun)
    xe = xs
    ye = ys * jnp.cos(ecl0 + decl * x)
    ze = ys * jnp.sin(ecl0 + decl * x)
    RA = norm(jnp.arctan2(ye, xe))
    Dec = norm(jnp.arctan2(ze, jnp.sqrt(xe ** 2 + ye ** 2)))
    return jnp.hstack((RA, Dec))


if __name__ == "__main__":
    # Parameter init matching the module's __init__:
    # [M0, dm, e0, w0, ecl0, a0, de, da, dw, decl]
    params = jnp.array(
        [0.0, 0.03, 0.0, 0.0, 0.0, 1.0, 0.0, 0.0, 0.0, 0.0], dtype=jnp.float32
    )

    key = jax.random.PRNGKey(0)

    # Small deterministic input: N time samples (days).  Exercises the
    # small-N path (grid=2, megacore split).
    N = 8
    x = jax.random.uniform(key, (N,), dtype=jnp.float32, minval=0.0, maxval=365.0)
    out = jax.block_until_ready(parameter_recovery_forward(x, params))
    ref = _reference_forward(x, params)
    assert out.shape == (N, 2), out.shape
    assert jnp.allclose(out, ref, atol=1e-4, rtol=1e-4), (out, ref)

    # Second test exercising the multi-tile grid path (grid > 2).
    N2 = 4096
    x2 = jax.random.uniform(
        jax.random.PRNGKey(1), (N2,), dtype=jnp.float32, minval=0.0, maxval=365.0
    )
    out2 = jax.block_until_ready(
        parameter_recovery_forward(x2, params, max_tile_rows=8)
    )
    ref2 = _reference_forward(x2, params)
    assert out2.shape == (N2, 2), out2.shape
    assert jnp.allclose(out2, ref2, atol=1e-4, rtol=1e-4)

    print("KERNEL_OK")
</pallas_src>

<mosaic_0001>
module attributes {stable_mosaic.version = 11 : i64} {
  func.func @_earth_kernel(%arg0: i32, %arg1: memref<10xf32, #tpu.memory_space<smem>>, %arg2: memref<8x128xf32, #tpu.memory_space<vmem>>, %arg3: memref<8x128xf32, #tpu.memory_space<vmem>>, %arg4: memref<8x128xf32, #tpu.memory_space<vmem>>) attributes {dimension_semantics = [#tpu.dimension_semantics<parallel>], iteration_bounds = array<i64: 2>, scalar_prefetch = 0 : i64, scratch_operands = 0 : i64, tpu.core_type = #tpu.core_type<tc>, window_params = [{transform_indices = @transform_0, window_bounds = array<i64: 10>}, {transform_indices = @transform_1, window_bounds = array<i64: 8, 128>}, {transform_indices = @transform_2, window_bounds = array<i64: 8, 128>}, {transform_indices = @transform_3, window_bounds = array<i64: 8, 128>}]} {
    %c0 = arith.constant 0 : index
    %0 = memref.load %arg1[%c0] : memref<10xf32, #tpu.memory_space<smem>>
    %c1 = arith.constant 1 : index
    %1 = memref.load %arg1[%c1] : memref<10xf32, #tpu.memory_space<smem>>
    %c2 = arith.constant 2 : index
    %2 = memref.load %arg1[%c2] : memref<10xf32, #tpu.memory_space<smem>>
    %c3 = arith.constant 3 : index
    %3 = memref.load %arg1[%c3] : memref<10xf32, #tpu.memory_space<smem>>
    %c4 = arith.constant 4 : index
    %4 = memref.load %arg1[%c4] : memref<10xf32, #tpu.memory_space<smem>>
    %c5 = arith.constant 5 : index
    %5 = memref.load %arg1[%c5] : memref<10xf32, #tpu.memory_space<smem>>
    %c6 = arith.constant 6 : index
    %6 = memref.load %arg1[%c6] : memref<10xf32, #tpu.memory_space<smem>>
    %c7 = arith.constant 7 : index
    %7 = memref.load %arg1[%c7] : memref<10xf32, #tpu.memory_space<smem>>
    %c8 = arith.constant 8 : index
    %8 = memref.load %arg1[%c8] : memref<10xf32, #tpu.memory_space<smem>>
    %c9 = arith.constant 9 : index
    %9 = memref.load %arg1[%c9] : memref<10xf32, #tpu.memory_space<smem>>
    %c0_0 = arith.constant 0 : index
    %c0_1 = arith.constant 0 : index
    %10 = vector.load %arg2[%c0_0, %c0_1] : memref<8x128xf32, #tpu.memory_space<vmem>>, vector<8x128xf32>
    %11 = vector.broadcast %1 : f32 to vector<8x128xf32>
    %12 = arith.mulf %11, %10 : vector<8x128xf32>
    %13 = vector.broadcast %0 : f32 to vector<8x128xf32>
    %14 = arith.addf %13, %12 : vector<8x128xf32>
    %cst = arith.constant 0.159154937 : f32
    %15 = vector.broadcast %cst : f32 to vector<8x128xf32>
    %16 = arith.mulf %14, %15 : vector<8x128xf32>
    %17 = math.floor %16 : vector<8x128xf32>
    %cst_2 = arith.constant 6.28318548 : f32
    %18 = vector.broadcast %cst_2 : f32 to vector<8x128xf32>
    %19 = arith.mulf %17, %18 : vector<8x128xf32>
    %20 = arith.subf %14, %19 : vector<8x128xf32>
    %21 = vector.broadcast %6 : f32 to vector<8x128xf32>
    %22 = arith.mulf %21, %10 : vector<8x128xf32>
    %23 = vector.broadcast %2 : f32 to vector<8x128xf32>
    %24 = arith.addf %23, %22 : vector<8x128xf32>
    %25 = vector.broadcast %7 : f32 to vector<8x128xf32>
    %26 = arith.mulf %25, %10 : vector<8x128xf32>
    %27 = vector.broadcast %5 : f32 to vector<8x128xf32>
    %28 = arith.addf %27, %26 : vector<8x128xf32>
    %29 = vector.broadcast %8 : f32 to vector<8x128xf32>
    %30 = arith.mulf %29, %10 : vector<8x128xf32>
    %31 = vector.broadcast %3 : f32 to vector<8x128xf32>
    %32 = arith.addf %31, %30 : vector<8x128xf32>
    %cst_3 = arith.constant 0.159154937 : f32
    %33 = vector.broadcast %cst_3 : f32 to vector<8x128xf32>
    %34 = arith.mulf %32, %33 : vector<8x128xf32>
    %35 = math.floor %34 : vector<8x128xf32>
    %cst_4 = arith.constant 6.28318548 : f32
    %36 = vector.broadcast %cst_4 : f32 to vector<8x128xf32>
    %37 = arith.mulf %35, %36 : vector<8x128xf32>
    %38 = arith.subf %32, %37 : vector<8x128xf32>
    %39 = math.sin %20 : vector<8x128xf32>
    %40 = arith.mulf %24, %39 : vector<8x128xf32>
    %41 = math.cos %20 : vector<8x128xf32>
    %42 = arith.mulf %24, %41 : vector<8x128xf32>
    %cst_5 = arith.constant 1.000000e+00 : f32
    %43 = vector.broadcast %cst_5 : f32 to vector<8x128xf32>
    %44 = arith.addf %43, %42 : vector<8x128xf32>
    %45 = arith.mulf %40, %44 : vector<8x128xf32>
    %46 = arith.addf %20, %45 : vector<8x128xf32>
    %47 = math.sin %46 : vector<8x128xf32>
    %48 = arith.mulf %24, %47 : vector<8x128xf32>
    %49 = arith.subf %46, %48 : vector<8x128xf32>
    %50 = arith.subf %49, %20 : vector<8x128xf32>
    %51 = math.cos %46 : vector<8x128xf32>
    %52 = arith.mulf %24, %51 : vector<8x128xf32>
    %cst_6 = arith.constant 1.000000e+00 : f32
    %53 = vector.broadcast %cst_6 : f32 to vector<8x128xf32>
    %54 = arith.subf %53, %52 : vector<8x128xf32>
    %55 = tpu.reciprocal %54 {approx = true} : vector<8x128xf32> -> vector<8x128xf32>
    %56 = arith.mulf %50, %55 : vector<8x128xf32>
    %57 = arith.subf %46, %56 : vector<8x128xf32>
    %58 = math.sin %57 : vector<8x128xf32>
    %59 = arith.mulf %24, %58 : vector<8x128xf32>
    %60 = arith.subf %57, %59 : vector<8x128xf32>
    %61 = arith.subf %60, %20 : vector<8x128xf32>
    %62 = math.cos %57 : vector<8x128xf32>
    %63 = arith.mulf %24, %62 : vector<8x128xf32>
    %cst_7 = arith.constant 1.000000e+00 : f32
    %64 = vector.broadcast %cst_7 : f32 to vector<8x128xf32>
    %65 = arith.subf %64, %63 : vector<8x128xf32>
    %66 = tpu.reciprocal %65 {approx = true} : vector<8x128xf32> -> vector<8x128xf32>
    %67 = arith.mulf %61, %66 : vector<8x128xf32>
    %68 = arith.subf %57, %67 : vector<8x128xf32>
    %69 = math.sin %68 : vector<8x128xf32>
    %70 = arith.mulf %24, %69 : vector<8x128xf32>
    %71 = arith.subf %68, %70 : vector<8x128xf32>
    %72 = arith.subf %71, %20 : vector<8x128xf32>
    %73 = math.cos %68 : vector<8x128xf32>
    %74 = arith.mulf %24, %73 : vector<8x128xf32>
    %cst_8 = arith.constant 1.000000e+00 : f32
    %75 = vector.broadcast %cst_8 : f32 to vector<8x128xf32>
    %76 = arith.subf %75, %74 : vector<8x128xf32>
    %77 = tpu.reciprocal %76 {approx = true} : vector<8x128xf32> -> vector<8x128xf32>
    %78 = arith.mulf %72, %77 : vector<8x128xf32>
    %79 = arith.subf %68, %78 : vector<8x128xf32>
    %80 = math.cos %79 : vector<8x128xf32>
    %81 = arith.subf %80, %24 : vector<8x128xf32>
    %82 = arith.mulf %28, %81 : vector<8x128xf32>
    %83 = arith.mulf %24, %24 : vector<8x128xf32>
    %cst_9 = arith.constant 1.000000e+00 : f32
    %84 = vector.broadcast %cst_9 : f32 to vector<8x128xf32>
    %85 = arith.subf %84, %83 : vector<8x128xf32>
    %86 = math.sqrt %85 : vector<8x128xf32>
    %87 = math.sin %79 : vector<8x128xf32>
    %88 = arith.mulf %86, %87 : vector<8x128xf32>
    %89 = arith.mulf %28, %88 : vector<8x128xf32>
    %90 = math.atan2 %89, %82 : vector<8x128xf32>
    %91 = arith.mulf %28, %90 : vector<8x128xf32>
    %92 = arith.mulf %82, %82 : vector<8x128xf32>
    %93 = arith.mulf %89, %89 : vector<8x128xf32>
    %94 = arith.addf %92, %93 : vector<8x128xf32>
    %95 = math.sqrt %94 : vector<8x128xf32>
    %96 = arith.addf %91, %38 : vector<8x128xf32>
    %97 = math.cos %96 : vector<8x128xf32>
    %98 = arith.mulf %95, %97 : vector<8x128xf32>
    %99 = math.sin %96 : vector<8x128xf32>
    %100 = arith.mulf %95, %99 : vector<8x128xf32>
    %101 = vector.broadcast %9 : f32 to vector<8x128xf32>
    %102 = arith.mulf %101, %10 : vector<8x128xf32>
    %103 = vector.broadcast %4 : f32 to vector<8x128xf32>
    %104 = arith.addf %103, %102 : vector<8x128xf32>
    %105 = math.cos %104 : vector<8x128xf32>
    %106 = arith.mulf %100, %105 : vector<8x128xf32>
    %107 = math.sin %104 : vector<8x128xf32>
    %108 = arith.mulf %100, %107 : vector<8x128xf32>
    %109 = math.atan2 %106, %98 : vector<8x128xf32>
    %cst_10 = arith.constant 0.000000e+00 : f32
    %110 = vector.broadcast %cst_10 : f32 to vector<8x128xf32>
    %111 = arith.cmpf olt, %109, %110 : vector<8x128xf32>
    %cst_11 = arith.constant 6.28318548 : f32
    %112 = vector.broadcast %cst_11 : f32 to vector<8x128xf32>
    %113 = arith.addf %109, %112 : vector<8x128xf32>
    %114 = arith.select %111, %113, %109 : vector<8x128xi1>, vector<8x128xf32>
    %115 = arith.mulf %98, %98 : vector<8x128xf32>
    %116 = arith.mulf %106, %106 : vector<8x128xf32>
    %117 = arith.addf %115, %116 : vector<8x128xf32>
    %118 = math.sqrt %117 : vector<8x128xf32>
    %119 = math.atan2 %108, %118 : vector<8x128xf32>
    %cst_12 = arith.constant 0.000000e+00 : f32
    %120 = vector.broadcast %cst_12 : f32 to vector<8x128xf32>
    %121 = arith.cmpf olt, %119, %120 : vector<8x128xf32>
    %cst_13 = arith.constant 6.28318548 : f32
    %122 = vector.broadcast %cst_13 : f32 to vector<8x128xf32>
    %123 = arith.addf %119, %122 : vector<8x128xf32>
    %124 = arith.select %121, %123, %119 : vector<8x128xi1>, vector<8x128xf32>
    %c0_14 = arith.constant 0 : index
    %c0_15 = arith.constant 0 : index
    %125 = vector.load %arg3[%c0_14, %c0_15] : memref<8x128xf32, #tpu.memory_space<vmem>>, vector<8x128xf32>
    tpu.vector_store %arg3[%c0_14, %c0_15], %114 {strides = array<i32>} : memref<8x128xf32, #tpu.memory_space<vmem>>, vector<8x128xf32>,
    %c0_16 = arith.constant 0 : index
    %c0_17 = arith.constant 0 : index
    %126 = vector.load %arg4[%c0_16, %c0_17] : memref<8x128xf32, #tpu.memory_space<vmem>>, vector<8x128xf32>
    tpu.vector_store %arg4[%c0_16, %c0_17], %124 {strides = array<i32>} : memref<8x128xf32, #tpu.memory_space<vmem>>, vector<8x128xf32>,
    return
  }
  func.func @transform_0(%arg0: i32) -> i32 {
    %c0_i32 = arith.constant 0 : i32
    %c0_i32_0 = arith.constant 0 : i32
    return %c0_i32 : i32
  }
  func.func @transform_1(%arg0: i32) -> (i32, i32) {
    %c0_i32 = arith.constant 0 : i32
    %c0_i32_0 = arith.constant 0 : i32
    return %arg0, %c0_i32 : i32, i32
  }
  func.func @transform_2(%arg0: i32) -> (i32, i32) {
    %c0_i32 = arith.constant 0 : i32
    %c0_i32_0 = arith.constant 0 : i32
    return %arg0, %c0_i32 : i32, i32
  }
  func.func @transform_3(%arg0: i32) -> (i32, i32) {
    %c0_i32 = arith.constant 0 : i32
    %c0_i32_0 = arith.constant 0 : i32
    return %arg0, %c0_i32 : i32, i32
  }
}

</mosaic_0001>

<llo_original>
// kernel: tpu_custom_call.1
$region0: #{tpu_custom_call.1}
  #allocation0 [shape = 'u32[]', space=smem, size = 0x4, offset = 0x4, fixed_abs, tag = 'smem constant byte address 0x4 - core index']
  #allocation1 [shape = 'u32[72,128]{1,0:T(1,128)}', space=vmem, size = 0x9000, scoped, tag = 'internal scratch']
  %s0 = inlined_call_operand.hbm [shape: f32[10], index: 0, kind: input, shape index: {}]
  %s1 = inlined_call_operand.hbm [shape: f32[16,128], index: 1, kind: input, shape index: {}]
  %s2 = inlined_call_operand.hbm [shape: f32[16,128], index: 2, kind: output, shape index: {0}]
  %s3 = inlined_call_operand.hbm [shape: f32[16,128], index: 3, kind: output, shape index: {1}]
  %4 = xla_tuple %s2, %s3
  %s5 = sld [smem:[#allocation0]]
  $region57: #{tpu_custom_call.1} parent=0
    _
  %s7 = ssub.s32 1, %s5
  %s8 = scalar_select 0, %s7, %s5
  $region1: #{tpu_custom_call.1} parent=0
    #allocation2 [shape = 'u8[512]{0}', space=smem, size = 0x200, scoped, tag = 'input window, operand 0, single buffered']
    #allocation3 [shape = 's32[2]{0}', space=sflag, size = 0x8, scoped, tag = 'scoped memory for tpu_custom_call.1']
    #allocation4 [shape = 's32[2]{0}', space=sflag, size = 0x8, scoped, tag = 'scoped memory for tpu_custom_call.1']
    #allocation5 [shape = 's32[2]{0}', space=sflag, size = 0x8, scoped, tag = 'scoped memory for tpu_custom_call.1']
    #allocation6 [shape = 'u8[8192]{0}', space=vmem, size = 0x2000, scoped, tag = 'input window, operand 1']
    #allocation7 [shape = 'u8[8192]{0}', space=vmem, size = 0x2000, scoped, tag = 'output window, operand 0']
    #allocation8 [shape = 'u8[8192]{0}', space=vmem, size = 0x2000, scoped, tag = 'output window, operand 1']
    #allocation9 [shape = 's32[2]{0}', space=sflag, size = 0x8, scoped, tag = 'scoped memory for tpu_custom_call.1']
    %9 = vsyncpa [#allocation5], 0
    %10 = vsyncpa [#allocation3], 0
    %s11 = scalar_lea.sflag [#allocation3], 1
    %12 = vsyncpa %s11, 0
    %13 = vsyncpa [#allocation4], 0
    %s14 = scalar_lea.sflag [#allocation4], 1
    %15 = vsyncpa %s14, 0
    %16 = vsyncpa [#allocation9], 0
    %s17 = scalar_lea.sflag [#allocation9], 1
    %18 = vsyncpa %s17, 0
    loop: start=0, step=1, limit=4
    $region2: #{tpu_custom_call.1} parent=1 // loop_pre_header
      _
    $region3: #{tpu_custom_call.1} parent=1 // loop_header
      %s20 = sphi 0, %s24
      %p21 = scmp.ge.s32.totalorder %s20, 4
      %s28 = sphi 0, %s28
      %s30 = sphi 0, %s28
      %s31 = sphi 0, %s30
      %s45 = sphi 0, %s31
      %s51 = sphi 0, %s53
      %s54 = sphi 0, %s51
      %s55 = sphi 0, %s54
      %s71 = sphi 0, %s55
      %s77 = sphi 0, %s79
      %s80 = sphi 0, %s77
      %s81 = sphi 0, %s80
      %s97 = sphi 0, %s81
      %s103 = sphi 0, %s105
      %s106 = sphi 0, %s103
      %s107 = sphi 0, %s106
      %s123 = sphi 0, %s107
    $region4: #{tpu_custom_call.1} parent=1 // loop_header_branch
      %23 = sbr.rel (%p21) target = $region8
    $region5: #{tpu_custom_call.1} parent=1 // loop_body
      %s25 = ssub.s32 %s20, 1
      %s26 = ssub.s32 %s20, 2
      %s27 = sadd.s32 %s20, 1
      %s29 = sadd.s32 %s28, 1
      %p32 = scmp.eq.s32.totalorder %s20, 1
      %p33 = scmp.ne.s32.totalorder %s28, %s30
      %p34 = scmp.eq.s32.totalorder %s20, 0
      %p35 = por %p33, %p34
      %p36 = scmp.ne.s32.totalorder %s28, %s30
      %p37 = scmp.eq.s32.totalorder %s25, 1
      %p38 = por %p36, %p37
      %p39 = scmp.ne.s32.totalorder %s30, %s31
      %p40 = scmp.eq.s32.totalorder %s25, 0
      %p41 = por %p39, %p40
      %p42 = scmp.ne.s32.totalorder %s30, %s31
      %p43 = scmp.eq.s32.totalorder %s26, 1
      %p44 = por %p42, %p43
      %p46 = scmp.ne.s32.totalorder %s31, %s45
      %p47 = scmp.eq.s32.totalorder %s26, 0
      %p48 = por %p46, %p47
      %s49 = ssub.s32 %s20, %s27
      %p50 = scmp.eq.s32.totalorder %s49, 0
      %s52 = sadd.s32 %s51, 1
      %s53 = scalar_select %p50, %s51, %s52
      %p56 = pneg %p50
      %p57 = scmp.eq.s32.totalorder %s20, 1
      %p58 = por %p56, %p57
      %p59 = scmp.ne.s32.totalorder %s51, %s54
      %p60 = scmp.eq.s32.totalorder %s20, 0
      %p61 = por %p59, %p60
      %p62 = scmp.ne.s32.totalorder %s51, %s54
      %p63 = scmp.eq.s32.totalorder %s25, 1
      %p64 = por %p62, %p63
      %p65 = scmp.ne.s32.totalorder %s54, %s55
      %p66 = scmp.eq.s32.totalorder %s25, 0
      %p67 = por %p65, %p66
      %p68 = scmp.ne.s32.totalorder %s54, %s55
      %p69 = scmp.eq.s32.totalorder %s26, 1
      %p70 = por %p68, %p69
      %p72 = scmp.ne.s32.totalorder %s55, %s71
      %p73 = scmp.eq.s32.totalorder %s26, 0
      %p74 = por %p72, %p73
      %s75 = ssub.s32 %s20, %s27
      %p76 = scmp.eq.s32.totalorder %s75, 0
      %s78 = sadd.s32 %s77, 1
      %s79 = scalar_select %p76, %s77, %s78
      %p82 = pneg %p76
      %p83 = scmp.eq.s32.totalorder %s20, 1
      %p84 = por %p82, %p83
      %p85 = scmp.ne.s32.totalorder %s77, %s80
      %p86 = scmp.eq.s32.totalorder %s20, 0
      %p87 = por %p85, %p86
      %p88 = scmp.ne.s32.totalorder %s77, %s80
      %p89 = scmp.eq.s32.totalorder %s25, 1
      %p90 = por %p88, %p89
      %p91 = scmp.ne.s32.totalorder %s80, %s81
      %p92 = scmp.eq.s32.totalorder %s25, 0
      %p93 = por %p91, %p92
      %p94 = scmp.ne.s32.totalorder %s80, %s81
      %p95 = scmp.eq.s32.totalorder %s26, 1
      %p96 = por %p94, %p95
      %p98 = scmp.ne.s32.totalorder %s81, %s97
      %p99 = scmp.eq.s32.totalorder %s26, 0
      %p100 = por %p98, %p99
      %s101 = ssub.s32 %s20, %s27
      %p102 = scmp.eq.s32.totalorder %s101, 0
      %s104 = sadd.s32 %s103, 1
      %s105 = scalar_select %p102, %s103, %s104
      %p108 = pneg %p102
      %p109 = scmp.eq.s32.totalorder %s20, 1
      %p110 = por %p108, %p109
      %p111 = scmp.ne.s32.totalorder %s103, %s106
      %p112 = scmp.eq.s32.totalorder %s20, 0
      %p113 = por %p111, %p112
      %p114 = scmp.ne.s32.totalorder %s103, %s106
      %p115 = scmp.eq.s32.totalorder %s25, 1
      %p116 = por %p114, %p115
      %p117 = scmp.ne.s32.totalorder %s106, %s107
      %p118 = scmp.eq.s32.totalorder %s25, 0
      %p119 = por %p117, %p118
      %p120 = scmp.ne.s32.totalorder %s106, %s107
      %p121 = scmp.eq.s32.totalorder %s26, 1
      %p122 = por %p120, %p121
      %p124 = scmp.ne.s32.totalorder %s107, %s123
      %p125 = scmp.eq.s32.totalorder %s26, 0
      %p126 = por %p124, %p125
      %p127 = scmp.le.s32.totalorder 1, %s20
      %p128 = scmp.lt.s32.totalorder %s20, 3
      %p129 = pnand %p127, %p128
      %p130 = pneg %p129
      // Predicated region
      $region9: #{tpu_custom_call.1} parent=5 // pred_check
        _
      $region10: #{tpu_custom_call.1} parent=5 // pred_check_branch
        %132 = sbr.rel (%p129) target = $region12
      $region11: #{tpu_custom_call.1} parent=5 // pred_region
        %s133 = ssub.s32 %s20, 1
        // Predicated region
        $region13: #{tpu_custom_call.1} parent=11 // pred_check
          %p134 = pneg %p41
        $region14: #{tpu_custom_call.1} parent=11 // pred_check_branch
          %136 = sbr.rel (%p134) target = $region16
        $region15: #{tpu_custom_call.1} parent=11 // pred_region
          %138 = vsyncadd [#allocation5], 0
          %s140 = sshll.u32 %s0, 4
          %s141 = int_to_ptr.hbm [resolvable:$true] %s140
          %143 = dma.hbm_to_smem %s141, 16, [#allocation2], [#allocation5]
        $region16: #{tpu_custom_call.1} parent=11 // pred_fallthru
          _
      $region12: #{tpu_custom_call.1} parent=5 // pred_fallthru
        _
      %p144 = scmp.lt.s32.totalorder %s20, 2
      // Predicated region
      $region17: #{tpu_custom_call.1} parent=5 // pred_check
        %p145 = pneg %p144
      $region18: #{tpu_custom_call.1} parent=5 // pred_check_branch
        %147 = sbr.rel (%p145) target = $region20
      $region19: #{tpu_custom_call.1} parent=5 // pred_region
        // Predicated region
        $region21: #{tpu_custom_call.1} parent=19 // pred_check
          %p148 = pneg %p61
        $region22: #{tpu_custom_call.1} parent=19 // pred_check_branch
          %150 = sbr.rel (%p148) target = $region24
        $region23: #{tpu_custom_call.1} parent=19 // pred_region
          %s151 = sand.u32 %s51, 1
          %s152 = scalar_lea.sflag [#allocation3], %s151
          %s153 = sand.u32 %s51, 1
          %s154 = smul.addr %s153, 8
          %s155 = scalar_lea.vmem [#allocation6], %s154
          %157 = vsyncadd %s152, 0
          %s158 = smul.addr %s20, 8
          %s159 = scalar_lea.hbm %s1, %s158
          %s161 = sshll.u32 %s159, 4
          %s162 = int_to_ptr.hbm [resolvable:$true] %s161
          %s163 = sshll.u32 %s155, 4
          %s164 = int_to_ptr.vmem [resolvable:$true] %s163
          %166 = dma.hbm_to_vmem [thread:$0]  %s162, 128, %s164, %s152
        $region24: #{tpu_custom_call.1} parent=19 // pred_fallthru
          _
      $region20: #{tpu_custom_call.1} parent=5 // pred_fallthru
        _
      %p167 = scmp.le.s32.totalorder 1, %s20
      %p168 = scmp.lt.s32.totalorder %s20, 3
      %p169 = pnand %p167, %p168
      %p170 = pneg %p169
      // Predicated region
      $region25: #{tpu_custom_call.1} parent=5 // pred_check
        _
      $region26: #{tpu_custom_call.1} parent=5 // pred_check_branch
        %172 = sbr.rel (%p169) target = $region28
      $region27: #{tpu_custom_call.1} parent=5 // pred_region
        %s173 = ssub.s32 %s20, 1
        // Predicated region
        $region29: #{tpu_custom_call.1} parent=27 // pred_check
          %p174 = pneg %p41
        $region30: #{tpu_custom_call.1} parent=27 // pred_check_branch
          %176 = sbr.rel (%p174) target = $region32
        $region31: #{tpu_custom_call.1} parent=27 // pred_region
          %178 = dma.done [#allocation5], 16
        $region32: #{tpu_custom_call.1} parent=27 // pred_fallthru
          _
        %s179 = sand.u32 %s54, 1
        %s180 = scalar_lea.sflag [#allocation3], %s179
        %s181 = sand.u32 %s54, 1
        %s182 = smul.addr %s181, 8
        %s183 = scalar_lea.vmem [#allocation6], %s182
        // Predicated region
        $region33: #{tpu_custom_call.1} parent=27 // pred_check
          %p184 = pneg %p67
        $region34: #{tpu_custom_call.1} parent=27 // pred_check_branch
          %186 = sbr.rel (%p184) target = $region36
        $region35: #{tpu_custom_call.1} parent=27 // pred_region
          %188 = dma.done %s180, 128
        $region36: #{tpu_custom_call.1} parent=27 // pred_fallthru
          _
        %189 = sfence
        %p190 = pneg %p41
        %p191 = pneg %p38
        %s192 = sand.u32 %s54, 1
        %s193 = scalar_lea.sflag [#allocation3], %s192
        %s194 = sand.u32 %s54, 1
        %s195 = smul.addr %s194, 8
        %s196 = scalar_lea.vmem [#allocation6], %s195
        %p197 = pneg %p67
        %p198 = pneg %p64
        %p199 = pneg %p93
        %p200 = pneg %p90
        %s201 = sand.u32 %s80, 1
        %s202 = scalar_lea.sflag [#allocation4], %s201
        %s203 = sand.u32 %s80, 1
        %s204 = smul.addr %s203, 8
        %s205 = scalar_lea.vmem [#allocation7], %s204
        %p206 = pneg %p119
        %p207 = pneg %p116
        %s208 = sand.u32 %s106, 1
        %s209 = scalar_lea.sflag [#allocation9], %s208
        %s210 = sand.u32 %s106, 1
        %s211 = smul.addr %s210, 8
        %s212 = scalar_lea.vmem [#allocation8], %s211
        %s213 = sld [smem:[#allocation2]]
        %s214 = sld [smem:[#allocation2 + $0x1]]
        %s215 = sld [smem:[#allocation2 + $0x2]]
        %s216 = sld [smem:[#allocation2 + $0x3]]
        %s217 = sld [smem:[#allocation2 + $0x4]]
        %s218 = sld [smem:[#allocation2 + $0x5]]
        %s219 = sld [smem:[#allocation2 + $0x6]]
        %s220 = sld [smem:[#allocation2 + $0x7]]
        %s221 = sld [smem:[#allocation2 + $0x8]]
        %s222 = sld [smem:[#allocation2 + $0x9]]
        %v223 = vld [vmem:[%s183] sm:$0xff]
        %v224 = vstv %s214
        %v225 = vmul.f32 %v224, %v223
        %v226 = vstv %s213
        %v227 = vadd.f32 %v226, %v225
        %v228 = vmul.f32 %v227, 0.15915494
        %v229 = vfloor.f32 %v228
        %v230 = vmul.f32 %v229, 6.2831855
        %v231 = vsub.f32 %v227, %v230
        %v232 = vstv %s219
        %v233 = vmul.f32 %v232, %v223
        %v234 = vstv %s215
        %v235 = vadd.f32 %v234, %v233
        %v236 = vstv %s220
        %v237 = vmul.f32 %v236, %v223
        %v238 = vstv %s218
        %v239 = vadd.f32 %v238, %v237
        %v240 = vstv %s221
        %v241 = vmul.f32 %v240, %v223
        %v242 = vstv %s216
        %v243 = vadd.f32 %v242, %v241
        %v244 = vmul.f32 %v243, 0.15915494
        %v245 = vfloor.f32 %v244
        %v246 = vmul.f32 %v245, 6.2831855
        %v247 = vsub.f32 %v243, %v246
        %v248 = vand.u32 2147483647, %v231
        %vm249 = vcmp.le.f32.partialorder %v248, 0.7853982
        %vm250 = vcmp.lt.s32.totalorder %v231, 0
        %v251 = vand.u32 %v231, 2139095040
        %v252 = vshrl.u32 %v251, 23
        %v253 = vsub.s32 %v252, 127
        %v254 = vand.u32 2147483647, %v231
        %v255 = vand.u32 %v254, 8388607
        %v256 = vor.u32 %v255, 8388608
        %v257 = vsub.s32 0, %v256
        %v258 = vadd.s32 %v253, 1
        %vm259 = vcmp.gt.s32.totalorder %v258, 0
        %v260 = vsel %vm259, %v258, 0
        %v261 = vshrl.u32 %v260, 5
        %v262 = vand.u32 %v260, 31
        %v263 = vsub.s32 32, %v262
        %v264 = vshrl.u32 683565275, %v263
        %v265 = vshll.u32 683565275, %v262
        %v266 = vshrl.u32 2475754826, %v263
        %v267 = vor.u32 %v265, %v266
        %v268 = vshll.u32 2475754826, %v262
        %v269 = vshrl.u32 2131351028, %v263
        %v270 = vor.u32 %v268, %v269
        %v271 = vshll.u32 2131351028, %v262
        %v272 = vshrl.u32 2102212464, %v263
        %v273 = vor.u32 %v271, %v272
        %v274 = vshll.u32 2102212464, %v262
        %v275 = vshrl.u32 920167782, %v263
        %v276 = vor.u32 %v274, %v275
        %v277 = vshll.u32 920167782, %v262
        %v278 = vshrl.u32 1326507024, %v263
        %v279 = vor.u32 %v277, %v278
        %vm280 = vcmp.lt.s32.totalorder %v261, 1
        %vm281 = vcmp.lt.s32.totalorder %v261, 2
        %vm282 = vcmp.lt.s32.totalorder %v261, 3
        %vm283 = vcmp.lt.s32.totalorder %v261, 4
        %v284 = vsel %vm280, %v264, %v267
        %v285 = vsel %vm283, %v273, 2102212464
        %v286 = vsel %vm282, %v270, %v285
        %v287 = vsel %vm281, %v284, %v286
        %v288 = vsel %vm280, %v267, %v270
        %v289 = vsel %vm283, %v276, 920167782
        %v290 = vsel %vm282, %v273, %v289
        %v291 = vsel %vm281, %v288, %v290
        %v292 = vsel %vm280, %v270, %v273
        %v293 = vsel %vm283, %v279, 1326507024
        %v294 = vsel %vm282, %v276, %v293
        %v295 = vsel %vm281, %v292, %v294
        %v296 = vshll.u32 %v256, 8
        %v297 = vand.u32 %v296, 65535
        %v298 = vshrl.u32 %v296, 16
        %v299 = vand.u32 %v295, 65535
        %v300 = vshrl.u32 %v295, 16
        %v301 = vmul.u32 %v297, %v299
        %v302 = vmul.u32 %v297, %v300
        %v303 = vmul.u32 %v298, %v299
        %v304 = vmul.u32 %v298, %v300
        %v305 = vshll.u32 %v302, 16
        %v306 = vshrl.u32 %v302, 16
        %v307 = vshll.u32 %v303, 16
        %v308 = vshrl.u32 %v303, 16
        %vm309 = vc.u32 %v301, %v305
        %v310 = vsel %vm309, 1, 0
        %v311 = vadd.s32 %v301, %v305
        %v312 = vadd.s32 %v304, %v310
        %vm313 = vc.u32 %v311, %v307
        %v314 = vsel %vm313, 1, 0
        %v315 = vadd.s32 %v311, %v307
        %v316 = vadd.s32 %v312, %v314
        %v317 = vadd.s32 %v316, %v306
        %v318 = vadd.s32 %v317, %v308
        %v319 = vand.u32 %v296, 65535
        %v320 = vshrl.u32 %v296, 16
        %v321 = vand.u32 %v291, 65535
        %v322 = vshrl.u32 %v291, 16
        %v323 = vmul.u32 %v319, %v321
        %v324 = vmul.u32 %v319, %v322
        %v325 = vmul.u32 %v320, %v321
        %v326 = vmul.u32 %v320, %v322
        %v327 = vshll.u32 %v324, 16
        %v328 = vshrl.u32 %v324, 16
        %v329 = vshll.u32 %v325, 16
        %v330 = vshrl.u32 %v325, 16
        %vm331 = vc.u32 %v323, %v327
        %v332 = vsel %vm331, 1, 0
        %v333 = vadd.s32 %v323, %v327
        %v334 = vadd.s32 %v326, %v332
        %vm335 = vc.u32 %v333, %v329
        %v336 = vsel %vm335, 1, 0
        %v337 = vadd.s32 %v333, %v329
        %v338 = vadd.s32 %v334, %v336
        %v339 = vadd.s32 %v338, %v328
        %v340 = vadd.s32 %v339, %v330
        %v341 = vmul.u32 %v296, %v287
        %v342 = vadd.s32 %v318, %v337
        %vm343 = vc.u32 %v318, %v337
        %v344 = vadd.s32 %v340, 1
        %v345 = vsel %vm343, %v344, %v340
        %v346 = vadd.s32 %v341, %v345
        %v347 = vadd.s32 %v346, 536870912
        %v348 = vshrl.u32 %v347, 30
        %v349 = vshll.u32 %v348, 30
        %v350 = vsub.s32 %v346, %v349
        %vm351 = vcmp.lt.s32.totalorder %v350, 0
        %v352 = vsub.s32 0, %v350
        %v353 = vsel %vm351, %v352, %v350
        %v354 = vclz %v353
        %v355 = vsub.s32 %v354, 2
        %vm356 = vcmp.gt.s32.totalorder 0, %v355
        %v357 = vsel %vm356, 0, %v355
        %v358 = vsub.s32 32, %v357
        %v359 = vshll.u32 %v350, %v357
        %v360 = vshrl.u32 %v342, %v358
        %v361 = vor.u32 %v359, %v360
        %v362 = vsub.s32 4294967266, %v357
        %v363 = vadd.s32 %v362, 127
        %v364 = vshll.u32 %v363, 23
        %v365 = vor.u32 4788187, %v364
        %v366 = vand.u32 2147483647, %v365
        %v368 = vcvt.s32.f32 %v361
        %v369 = vmul.f32 %v368, %v366
        %v370 = vxor.u32 %v369, 2147483648
        %v371 = vsel %vm250, %v370, %v369
        %v372 = vsub.s32 4, %v348
        %v373 = vsel %vm250, %v372, %v348
        %v374 = vsel %vm249, %v231, %v371
        %v375 = vsel %vm249, 0, %v373
        %v376 = vmul.f32 %v374, %v374
        %v377 = vmul.f32 %v376, -0.001358992
        %v378 = vadd.f32 %v377, 0.041655596
        %v379 = vmul.f32 %v376, %v378
        %v380 = vadd.f32 %v379, -0.4999988
        %v381 = vmul.f32 %v376, %v380
        %v382 = vadd.f32 1.0, %v381
        %v383 = vmul.f32 %v374, %v374
        %v384 = vmul.f32 %v383, -0.00019511016
        %v385 = vadd.f32 %v384, 0.008332121
        %v386 = vmul.f32 %v383, %v385
        %v387 = vadd.f32 %v386, -0.16666654
        %v388 = vmul.f32 %v383, %v387
        %v389 = vadd.f32 %v388, 1.0
        %v390 = vmul.f32 %v389, %v374
        %vm391 = vweird.f32 %v231
        %v392 = vadd.s32 %v375, 3
        %v393 = vand.u32 %v392, 3
        %vm394 = vcmp.lt.s32.totalorder %v393, 2
        %vm395 = vcmp.eq.s32.totalorder %v393, 0
        %v396 = vxor.u32 %v390, 2147483648
        %v397 = vsel %vm395, %v382, %v396
        %vm398 = vcmp.eq.s32.totalorder %v393, 2
        %v399 = vxor.u32 %v382, 2147483648
        %v400 = vsel %vm398, %v399, %v390
        %v401 = vsel %vm394, %v397, %v400
        %v402 = vsel %vm391, nan, %v401
        %v403 = vmul.f32 %v235, %v402
        %v404 = vand.u32 2147483647, %v231
        %vm405 = vcmp.le.f32.partialorder %v404, 0.7853982
        %vm406 = vcmp.lt.s32.totalorder %v231, 0
        %v407 = vand.u32 %v231, 2139095040
        %v408 = vshrl.u32 %v407, 23
        %v409 = vsub.s32 %v408, 127
        %v410 = vand.u32 2147483647, %v231
        %v411 = vand.u32 %v410, 8388607
        %v412 = vor.u32 %v411, 8388608
        %v413 = vsub.s32 0, %v412
        %v414 = vadd.s32 %v409, 1
        %vm415 = vcmp.gt.s32.totalorder %v414, 0
        %v416 = vsel %vm415, %v414, 0
        %v417 = vshrl.u32 %v416, 5
        %v418 = vand.u32 %v416, 31
        %v419 = vsub.s32 32, %v418
        %v420 = vshrl.u32 683565275, %v419
        %v421 = vshll.u32 683565275, %v418
        %v422 = vshrl.u32 2475754826, %v419
        %v423 = vor.u32 %v421, %v422
        %v424 = vshll.u32 2475754826, %v418
        %v425 = vshrl.u32 2131351028, %v419
        %v426 = vor.u32 %v424, %v425
        %v427 = vshll.u32 2131351028, %v418
        %v428 = vshrl.u32 2102212464, %v419
        %v429 = vor.u32 %v427, %v428
        %v430 = vshll.u32 2102212464, %v418
        %v431 = vshrl.u32 920167782, %v419
        %v432 = vor.u32 %v430, %v431
        %v433 = vshll.u32 920167782, %v418
        %v434 = vshrl.u32 1326507024, %v419
        %v435 = vor.u32 %v433, %v434
        %vm436 = vcmp.lt.s32.totalorder %v417, 1
        %vm437 = vcmp.lt.s32.totalorder %v417, 2
        %vm438 = vcmp.lt.s32.totalorder %v417, 3
        %vm439 = vcmp.lt.s32.totalorder %v417, 4
        %v440 = vsel %vm436, %v420, %v423
        %v441 = vsel %vm439, %v429, 2102212464
        %v442 = vsel %vm438, %v426, %v441
        %v443 = vsel %vm437, %v440, %v442
        %v444 = vsel %vm436, %v423, %v426
        %v445 = vsel %vm439, %v432, 920167782
        %v446 = vsel %vm438, %v429, %v445
        %v447 = vsel %vm437, %v444, %v446
        %v448 = vsel %vm436, %v426, %v429
        %v449 = vsel %vm439, %v435, 1326507024
        %v450 = vsel %vm438, %v432, %v449
        %v451 = vsel %vm437, %v448, %v450
        %v452 = vshll.u32 %v412, 8
        %v453 = vand.u32 %v452, 65535
        %v454 = vshrl.u32 %v452, 16
        %v455 = vand.u32 %v451, 65535
        %v456 = vshrl.u32 %v451, 16
        %v457 = vmul.u32 %v453, %v455
        %v458 = vmul.u32 %v453, %v456
        %v459 = vmul.u32 %v454, %v455
        %v460 = vmul.u32 %v454, %v456
        %v461 = vshll.u32 %v458, 16
        %v462 = vshrl.u32 %v458, 16
        %v463 = vshll.u32 %v459, 16
        %v464 = vshrl.u32 %v459, 16
        %vm465 = vc.u32 %v457, %v461
        %v466 = vsel %vm465, 1, 0
        %v467 = vadd.s32 %v457, %v461
        %v468 = vadd.s32 %v460, %v466
        %vm469 = vc.u32 %v467, %v463
        %v470 = vsel %vm469, 1, 0
        %v471 = vadd.s32 %v467, %v463
        %v472 = vadd.s32 %v468, %v470
        %v473 = vadd.s32 %v472, %v462
        %v474 = vadd.s32 %v473, %v464
        %v475 = vand.u32 %v452, 65535
        %v476 = vshrl.u32 %v452, 16
        %v477 = vand.u32 %v447, 65535
        %v478 = vshrl.u32 %v447, 16
        %v479 = vmul.u32 %v475, %v477
        %v480 = vmul.u32 %v475, %v478
        %v481 = vmul.u32 %v476, %v477
        %v482 = vmul.u32 %v476, %v478
        %v483 = vshll.u32 %v480, 16
        %v484 = vshrl.u32 %v480, 16
        %v485 = vshll.u32 %v481, 16
        %v486 = vshrl.u32 %v481, 16
        %vm487 = vc.u32 %v479, %v483
        %v488 = vsel %vm487, 1, 0
        %v489 = vadd.s32 %v479, %v483
        %v490 = vadd.s32 %v482, %v488
        %vm491 = vc.u32 %v489, %v485
        %v492 = vsel %vm491, 1, 0
        %v493 = vadd.s32 %v489, %v485
        %v494 = vadd.s32 %v490, %v492
        %v495 = vadd.s32 %v494, %v484
        %v496 = vadd.s32 %v495, %v486
        %v497 = vmul.u32 %v452, %v443
        %v498 = vadd.s32 %v474, %v493
        %vm499 = vc.u32 %v474, %v493
        %v500 = vadd.s32 %v496, 1
        %v501 = vsel %vm499, %v500, %v496
        %v502 = vadd.s32 %v497, %v501
        %v503 = vadd.s32 %v502, 536870912
        %v504 = vshrl.u32 %v503, 30
        %v505 = vshll.u32 %v504, 30
        %v506 = vsub.s32 %v502, %v505
        %vm507 = vcmp.lt.s32.totalorder %v506, 0
        %v508 = vsub.s32 0, %v506
        %v509 = vsel %vm507, %v508, %v506
        %v510 = vclz %v509
        %v511 = vsub.s32 %v510, 2
        %vm512 = vcmp.gt.s32.totalorder 0, %v511
        %v513 = vsel %vm512, 0, %v511
        %v514 = vsub.s32 32, %v513
        %v515 = vshll.u32 %v506, %v513
        %v516 = vshrl.u32 %v498, %v514
        %v517 = vor.u32 %v515, %v516
        %v518 = vsub.s32 4294967266, %v513
        %v519 = vadd.s32 %v518, 127
        %v520 = vshll.u32 %v519, 23
        %v521 = vor.u32 4788187, %v520
        %v522 = vand.u32 2147483647, %v521
        %v524 = vcvt.s32.f32 %v517
        %v525 = vmul.f32 %v524, %v522
        %v526 = vxor.u32 %v525, 2147483648
        %v527 = vsel %vm406, %v526, %v525
        %v528 = vsub.s32 4, %v504
        %v529 = vsel %vm406, %v528, %v504
        %v530 = vsel %vm405, %v231, %v527
        %v531 = vsel %vm405, 0, %v529
        %v532 = vmul.f32 %v530, %v530
        %v533 = vmul.f32 %v532, -0.001358992
        %v534 = vadd.f32 %v533, 0.041655596
        %v535 = vmul.f32 %v532, %v534
        %v536 = vadd.f32 %v535, -0.4999988
        %v537 = vmul.f32 %v532, %v536
        %v538 = vadd.f32 1.0, %v537
        %v539 = vmul.f32 %v530, %v530
        %v540 = vmul.f32 %v539, -0.00019511016
        %v541 = vadd.f32 %v540, 0.008332121
        %v542 = vmul.f32 %v539, %v541
        %v543 = vadd.f32 %v542, -0.16666654
        %v544 = vmul.f32 %v539, %v543
        %v545 = vadd.f32 %v544, 1.0
        %v546 = vmul.f32 %v545, %v530
        %vm547 = vweird.f32 %v231
        %v548 = vand.u32 %v531, 3
        %vm549 = vcmp.lt.s32.totalorder %v548, 2
        %vm550 = vcmp.eq.s32.totalorder %v548, 0
        %v551 = vxor.u32 %v546, 2147483648
        %v552 = vsel %vm550, %v538, %v551
        %vm553 = vcmp.eq.s32.totalorder %v548, 2
        %v554 = vxor.u32 %v538, 2147483648
        %v555 = vsel %vm553, %v554, %v546
        %v556 = vsel %vm549, %v552, %v555
        %v557 = vsel %vm547, nan, %v556
        %v558 = vmul.f32 %v235, %v557
        %v559 = vadd.f32 %v558, 1.0
        %v560 = vmul.f32 %v403, %v559
        %v561 = vadd.f32 %v231, %v560
        %v562 = vand.u32 2147483647, %v561
        %vm563 = vcmp.le.f32.partialorder %v562, 0.7853982
        %vm564 = vcmp.lt.s32.totalorder %v561, 0
        %v565 = vand.u32 %v561, 2139095040
        %v566 = vshrl.u32 %v565, 23
        %v567 = vsub.s32 %v566, 127
        %v568 = vand.u32 2147483647, %v561
        %v569 = vand.u32 %v568, 8388607
        %v570 = vor.u32 %v569, 8388608
        %v571 = vsub.s32 0, %v570
        %v572 = vadd.s32 %v567, 1
        %vm573 = vcmp.gt.s32.totalorder %v572, 0
        %v574 = vsel %vm573, %v572, 0
        %v575 = vshrl.u32 %v574, 5
        %v576 = vand.u32 %v574, 31
        %v577 = vsub.s32 32, %v576
        %v578 = vshrl.u32 683565275, %v577
        %v579 = vshll.u32 683565275, %v576
        %v580 = vshrl.u32 2475754826, %v577
        %v581 = vor.u32 %v579, %v580
        %v582 = vshll.u32 2475754826, %v576
        %v583 = vshrl.u32 2131351028, %v577
        %v584 = vor.u32 %v582, %v583
        %v585 = vshll.u32 2131351028, %v576
        %v586 = vshrl.u32 2102212464, %v577
        %v587 = vor.u32 %v585, %v586
        %v588 = vshll.u32 2102212464, %v576
        %v589 = vshrl.u32 920167782, %v577
        %v590 = vor.u32 %v588, %v589
        %v591 = vshll.u32 920167782, %v576
        %v592 = vshrl.u32 1326507024, %v577
        %v593 = vor.u32 %v591, %v592
        %vm594 = vcmp.lt.s32.totalorder %v575, 1
        %vm595 = vcmp.lt.s32.totalorder %v575, 2
        %vm596 = vcmp.lt.s32.totalorder %v575, 3
        %vm597 = vcmp.lt.s32.totalorder %v575, 4
        %v598 = vsel %vm594, %v578, %v581
        %v599 = vsel %vm597, %v587, 2102212464
        %v600 = vsel %vm596, %v584, %v599
        %v601 = vsel %vm595, %v598, %v600
        %v602 = vsel %vm594, %v581, %v584
        %v603 = vsel %vm597, %v590, 920167782
        %v604 = vsel %vm596, %v587, %v603
        %v605 = vsel %vm595, %v602, %v604
        %v606 = vsel %vm594, %v584, %v587
        %v607 = vsel %vm597, %v593, 1326507024
        %v608 = vsel %vm596, %v590, %v607
        %v609 = vsel %vm595, %v606, %v608
        %v610 = vshll.u32 %v570, 8
        %v611 = vand.u32 %v610, 65535
        %v612 = vshrl.u32 %v610, 16
        %v613 = vand.u32 %v609, 65535
        %v614 = vshrl.u32 %v609, 16
        %v615 = vmul.u32 %v611, %v613
        %v616 = vmul.u32 %v611, %v614
        %v617 = vmul.u32 %v612, %v613
        %v618 = vmul.u32 %v612, %v614
        %v619 = vshll.u32 %v616, 16
        %v620 = vshrl.u32 %v616, 16
        %v621 = vshll.u32 %v617, 16
        %v622 = vshrl.u32 %v617, 16
        %vm623 = vc.u32 %v615, %v619
        %v624 = vsel %vm623, 1, 0
        %v625 = vadd.s32 %v615, %v619
        %v626 = vadd.s32 %v618, %v624
        %vm627 = vc.u32 %v625, %v621
        %v628 = vsel %vm627, 1, 0
        %v629 = vadd.s32 %v625, %v621
        %v630 = vadd.s32 %v626, %v628
        %v631 = vadd.s32 %v630, %v620
        %v632 = vadd.s32 %v631, %v622
        %v633 = vand.u32 %v610, 65535
        %v634 = vshrl.u32 %v610, 16
        %v635 = vand.u32 %v605, 65535
        %v636 = vshrl.u32 %v605, 16
        %v637 = vmul.u32 %v633, %v635
        %v638 = vmul.u32 %v633, %v636
        %v639 = vmul.u32 %v634, %v635
        %v640 = vmul.u32 %v634, %v636
        %v641 = vshll.u32 %v638, 16
        %v642 = vshrl.u32 %v638, 16
        %v643 = vshll.u32 %v639, 16
        %v644 = vshrl.u32 %v639, 16
        %vm645 = vc.u32 %v637, %v641
        %v646 = vsel %vm645, 1, 0
        %v647 = vadd.s32 %v637, %v641
        %v648 = vadd.s32 %v640, %v646
        %vm649 = vc.u32 %v647, %v643
        %v650 = vsel %vm649, 1, 0
        %v651 = vadd.s32 %v647, %v643
        %v652 = vadd.s32 %v648, %v650
        %v653 = vadd.s32 %v652, %v642
        %v654 = vadd.s32 %v653, %v644
        %v655 = vmul.u32 %v610, %v601
        %v656 = vadd.s32 %v632, %v651
        %vm657 = vc.u32 %v632, %v651
        %v658 = vadd.s32 %v654, 1
        %v659 = vsel %vm657, %v658, %v654
        %v660 = vadd.s32 %v655, %v659
        %v661 = vadd.s32 %v660, 536870912
        %v662 = vshrl.u32 %v661, 30
        %v663 = vshll.u32 %v662, 30
        %v664 = vsub.s32 %v660, %v663
        %vm665 = vcmp.lt.s32.totalorder %v664, 0
        %v666 = vsub.s32 0, %v664
        %v667 = vsel %vm665, %v666, %v664
        %v668 = vclz %v667
        %v669 = vsub.s32 %v668, 2
        %vm670 = vcmp.gt.s32.totalorder 0, %v669
        %v671 = vsel %vm670, 0, %v669
        %v672 = vsub.s32 32, %v671
        %v673 = vshll.u32 %v664, %v671
        %v674 = vshrl.u32 %v656, %v672
        %v675 = vor.u32 %v673, %v674
        %v676 = vsub.s32 4294967266, %v671
        %v677 = vadd.s32 %v676, 127
        %v678 = vshll.u32 %v677, 23
        %v679 = vor.u32 4788187, %v678
        %v680 = vand.u32 2147483647, %v679
        %v682 = vcvt.s32.f32 %v675
        %v683 = vmul.f32 %v682, %v680
        %v684 = vxor.u32 %v683, 2147483648
        %v685 = vsel %vm564, %v684, %v683
        %v686 = vsub.s32 4, %v662
        %v687 = vsel %vm564, %v686, %v662
        %v688 = vsel %vm563, %v561, %v685
        %v689 = vsel %vm563, 0, %v687
        %v690 = vmul.f32 %v688, %v688
        %v691 = vmul.f32 %v690, -0.001358992
        %v692 = vadd.f32 %v691, 0.041655596
        %v693 = vmul.f32 %v690, %v692
        %v694 = vadd.f32 %v693, -0.4999988
        %v695 = vmul.f32 %v690, %v694
        %v696 = vadd.f32 1.0, %v695
        %v697 = vmul.f32 %v688, %v688
        %v698 = vmul.f32 %v697, -0.00019511016
        %v699 = vadd.f32 %v698, 0.008332121
        %v700 = vmul.f32 %v697, %v699
        %v701 = vadd.f32 %v700, -0.16666654
        %v702 = vmul.f32 %v697, %v701
        %v703 = vadd.f32 %v702, 1.0
        %v704 = vmul.f32 %v703, %v688
        %vm705 = vweird.f32 %v561
        %v706 = vadd.s32 %v689, 3
        %v707 = vand.u32 %v706, 3
        %vm708 = vcmp.lt.s32.totalorder %v707, 2
        %vm709 = vcmp.eq.s32.totalorder %v707, 0
        %v710 = vxor.u32 %v704, 2147483648
        %v711 = vsel %vm709, %v696, %v710
        %vm712 = vcmp.eq.s32.totalorder %v707, 2
        %v713 = vxor.u32 %v696, 2147483648
        %v714 = vsel %vm712, %v713, %v704
        %v715 = vsel %vm708, %v711, %v714
        %v716 = vsel %vm705, nan, %v715
        %v717 = vmul.f32 %v235, %v716
        %v718 = vsub.f32 %v561, %v717
        %v719 = vsub.f32 %v718, %v231
        %v720 = vand.u32 2147483647, %v561
        %vm721 = vcmp.le.f32.partialorder %v720, 0.7853982
        %vm722 = vcmp.lt.s32.totalorder %v561, 0
        %v723 = vand.u32 %v561, 2139095040
        %v724 = vshrl.u32 %v723, 23
        %v725 = vsub.s32 %v724, 127
        %v726 = vand.u32 2147483647, %v561
        %v727 = vand.u32 %v726, 8388607
        %v728 = vor.u32 %v727, 8388608
        %v729 = vsub.s32 0, %v728
        %v730 = vadd.s32 %v725, 1
        %vm731 = vcmp.gt.s32.totalorder %v730, 0
        %v732 = vsel %vm731, %v730, 0
        %v733 = vshrl.u32 %v732, 5
        %v734 = vand.u32 %v732, 31
        %v735 = vsub.s32 32, %v734
        %v736 = vshrl.u32 683565275, %v735
        %v737 = vshll.u32 683565275, %v734
        %v738 = vshrl.u32 2475754826, %v735
        %v739 = vor.u32 %v737, %v738
        %v740 = vshll.u32 2475754826, %v734
        %v741 = vshrl.u32 2131351028, %v735
        %v742 = vor.u32 %v740, %v741
        %v743 = vshll.u32 2131351028, %v734
        %v744 = vshrl.u32 2102212464, %v735
        %v745 = vor.u32 %v743, %v744
        %v746 = vshll.u32 2102212464, %v734
        %v747 = vshrl.u32 920167782, %v735
        %v748 = vor.u32 %v746, %v747
        %v749 = vshll.u32 920167782, %v734
        %v750 = vshrl.u32 1326507024, %v735
        %v751 = vor.u32 %v749, %v750
        %vm752 = vcmp.lt.s32.totalorder %v733, 1
        %vm753 = vcmp.lt.s32.totalorder %v733, 2
        %vm754 = vcmp.lt.s32.totalorder %v733, 3
        %vm755 = vcmp.lt.s32.totalorder %v733, 4
        %v756 = vsel %vm752, %v736, %v739
        %v757 = vsel %vm755, %v745, 2102212464
        %v758 = vsel %vm754, %v742, %v757
        %v759 = vsel %vm753, %v756, %v758
        %v760 = vsel %vm752, %v739, %v742
        %v761 = vsel %vm755, %v748, 920167782
        %v762 = vsel %vm754, %v745, %v761
        %v763 = vsel %vm753, %v760, %v762
        %v764 = vsel %vm752, %v742, %v745
        %v765 = vsel %vm755, %v751, 1326507024
        %v766 = vsel %vm754, %v748, %v765
        %v767 = vsel %vm753, %v764, %v766
        %v768 = vshll.u32 %v728, 8
        %v769 = vand.u32 %v768, 65535
        %v770 = vshrl.u32 %v768, 16
        %v771 = vand.u32 %v767, 65535
        %v772 = vshrl.u32 %v767, 16
        %v773 = vmul.u32 %v769, %v771
        %v774 = vmul.u32 %v769, %v772
        %v775 = vmul.u32 %v770, %v771
        %v776 = vmul.u32 %v770, %v772
        %v777 = vshll.u32 %v774, 16
        %v778 = vshrl.u32 %v774, 16
        %v779 = vshll.u32 %v775, 16
        %v780 = vshrl.u32 %v775, 16
        %vm781 = vc.u32 %v773, %v777
        %v782 = vsel %vm781, 1, 0
        %v783 = vadd.s32 %v773, %v777
        %v784 = vadd.s32 %v776, %v782
        %vm785 = vc.u32 %v783, %v779
        %v786 = vsel %vm785, 1, 0
        %v787 = vadd.s32 %v783, %v779
        %v788 = vadd.s32 %v784, %v786
        %v789 = vadd.s32 %v788, %v778
        %v790 = vadd.s32 %v789, %v780
        %v791 = vand.u32 %v768, 65535
        %v792 = vshrl.u32 %v768, 16
        %v793 = vand.u32 %v763, 65535
        %v794 = vshrl.u32 %v763, 16
        %v795 = vmul.u32 %v791, %v793
        %v796 = vmul.u32 %v791, %v794
        %v797 = vmul.u32 %v792, %v793
        %v798 = vmul.u32 %v792, %v794
        %v799 = vshll.u32 %v796, 16
        %v800 = vshrl.u32 %v796, 16
        %v801 = vshll.u32 %v797, 16
        %v802 = vshrl.u32 %v797, 16
        %vm803 = vc.u32 %v795, %v799
        %v804 = vsel %vm803, 1, 0
        %v805 = vadd.s32 %v795, %v799
        %v806 = vadd.s32 %v798, %v804
        %vm807 = vc.u32 %v805, %v801
        %v808 = vsel %vm807, 1, 0
        %v809 = vadd.s32 %v805, %v801
        %v810 = vadd.s32 %v806, %v808
        %v811 = vadd.s32 %v810, %v800
        %v812 = vadd.s32 %v811, %v802
        %v813 = vmul.u32 %v768, %v759
        %v814 = vadd.s32 %v790, %v809
        %vm815 = vc.u32 %v790, %v809
        %v816 = vadd.s32 %v812, 1
        %v817 = vsel %vm815, %v816, %v812
        %v818 = vadd.s32 %v813, %v817
        %v819 = vadd.s32 %v818, 536870912
        %v820 = vshrl.u32 %v819, 30
        %v821 = vshll.u32 %v820, 30
        %v822 = vsub.s32 %v818, %v821
        %vm823 = vcmp.lt.s32.totalorder %v822, 0
        %v824 = vsub.s32 0, %v822
        %v825 = vsel %vm823, %v824, %v822
        %v826 = vclz %v825
        %v827 = vsub.s32 %v826, 2
        %vm828 = vcmp.gt.s32.totalorder 0, %v827
        %v829 = vsel %vm828, 0, %v827
        %v830 = vsub.s32 32, %v829
        %v831 = vshll.u32 %v822, %v829
        %v832 = vshrl.u32 %v814, %v830
        %v833 = vor.u32 %v831, %v832
        %v834 = vsub.s32 4294967266, %v829
        %v835 = vadd.s32 %v834, 127
        %v836 = vshll.u32 %v835, 23
        %v837 = vor.u32 4788187, %v836
        %v838 = vand.u32 2147483647, %v837
        %v840 = vcvt.s32.f32 %v833
        %v841 = vmul.f32 %v840, %v838
        %v842 = vxor.u32 %v841, 2147483648
        %v843 = vsel %vm722, %v842, %v841
        %v844 = vsub.s32 4, %v820
        %v845 = vsel %vm722, %v844, %v820
        %v846 = vsel %vm721, %v561, %v843
        %v847 = vsel %vm721, 0, %v845
        %v848 = vmul.f32 %v846, %v846
        %v849 = vmul.f32 %v848, -0.001358992
        %v850 = vadd.f32 %v849, 0.041655596
        %v851 = vmul.f32 %v848, %v850
        %v852 = vadd.f32 %v851, -0.4999988
        %v853 = vmul.f32 %v848, %v852
        %v854 = vadd.f32 1.0, %v853
        %v855 = vmul.f32 %v846, %v846
        %v856 = vmul.f32 %v855, -0.00019511016
        %v857 = vadd.f32 %v856, 0.008332121
        %v858 = vmul.f32 %v855, %v857
        %v859 = vadd.f32 %v858, -0.16666654
        %v860 = vmul.f32 %v855, %v859
        %v861 = vadd.f32 %v860, 1.0
        %v862 = vmul.f32 %v861, %v846
        %vm863 = vweird.f32 %v561
        %v864 = vand.u32 %v847, 3
        %vm865 = vcmp.lt.s32.totalorder %v864, 2
        %vm866 = vcmp.eq.s32.totalorder %v864, 0
        %v867 = vxor.u32 %v862, 2147483648
        %v868 = vsel %vm866, %v854, %v867
        %vm869 = vcmp.eq.s32.totalorder %v864, 2
        %v870 = vxor.u32 %v854, 2147483648
        %v871 = vsel %vm869, %v870, %v862
        %v872 = vsel %vm865, %v868, %v871
        %v873 = vsel %vm863, nan, %v872
        %v874 = vmul.f32 %v235, %v873
        %v875 = vsub.f32 1.0, %v874
        %v876 = vrcp.pop %v875
        %v877 = vmul.f32 %v719, %v876
        %v878 = vsub.f32 %v561, %v877
        %v879 = vand.u32 2147483647, %v878
        %vm880 = vcmp.le.f32.partialorder %v879, 0.7853982
        %vm881 = vcmp.lt.s32.totalorder %v878, 0
        %v882 = vand.u32 %v878, 2139095040
        %v883 = vshrl.u32 %v882, 23
        %v884 = vsub.s32 %v883, 127
        %v885 = vand.u32 2147483647, %v878
        %v886 = vand.u32 %v885, 8388607
        %v887 = vor.u32 %v886, 8388608
        %v888 = vsub.s32 0, %v887
        %v889 = vadd.s32 %v884, 1
        %vm890 = vcmp.gt.s32.totalorder %v889, 0
        %v891 = vsel %vm890, %v889, 0
        %v892 = vshrl.u32 %v891, 5
        %v893 = vand.u32 %v891, 31
        %v894 = vsub.s32 32, %v893
        %v895 = vshrl.u32 683565275, %v894
        %v896 = vshll.u32 683565275, %v893
        %v897 = vshrl.u32 2475754826, %v894
        %v898 = vor.u32 %v896, %v897
        %v899 = vshll.u32 2475754826, %v893
        %v900 = vshrl.u32 2131351028, %v894
        %v901 = vor.u32 %v899, %v900
        %v902 = vshll.u32 2131351028, %v893
        %v903 = vshrl.u32 2102212464, %v894
        %v904 = vor.u32 %v902, %v903
        %v905 = vshll.u32 2102212464, %v893
        %v906 = vshrl.u32 920167782, %v894
        %v907 = vor.u32 %v905, %v906
        %v908 = vshll.u32 920167782, %v893
        %v909 = vshrl.u32 1326507024, %v894
        %v910 = vor.u32 %v908, %v909
        %vm911 = vcmp.lt.s32.totalorder %v892, 1
        %vm912 = vcmp.lt.s32.totalorder %v892, 2
        %vm913 = vcmp.lt.s32.totalorder %v892, 3
        %vm914 = vcmp.lt.s32.totalorder %v892, 4
        %v915 = vsel %vm911, %v895, %v898
        %v916 = vsel %vm914, %v904, 2102212464
        %v917 = vsel %vm913, %v901, %v916
        %v918 = vsel %vm912, %v915, %v917
        %v919 = vsel %vm911, %v898, %v901
        %v920 = vsel %vm914, %v907, 920167782
        %v921 = vsel %vm913, %v904, %v920
        %v922 = vsel %vm912, %v919, %v921
        %v923 = vsel %vm911, %v901, %v904
        %v924 = vsel %vm914, %v910, 1326507024
        %v925 = vsel %vm913, %v907, %v924
        %v926 = vsel %vm912, %v923, %v925
        %v927 = vshll.u32 %v887, 8
        %v928 = vand.u32 %v927, 65535
        %v929 = vshrl.u32 %v927, 16
        %v930 = vand.u32 %v926, 65535
        %v931 = vshrl.u32 %v926, 16
        %v932 = vmul.u32 %v928, %v930
        %v933 = vmul.u32 %v928, %v931
        %v934 = vmul.u32 %v929, %v930
        %v935 = vmul.u32 %v929, %v931
        %v936 = vshll.u32 %v933, 16
        %v937 = vshrl.u32 %v933, 16
        %v938 = vshll.u32 %v934, 16
        %v939 = vshrl.u32 %v934, 16
        %vm940 = vc.u32 %v932, %v936
        %v941 = vsel %vm940, 1, 0
        %v942 = vadd.s32 %v932, %v936
        %v943 = vadd.s32 %v935, %v941
        %vm944 = vc.u32 %v942, %v938
        %v945 = vsel %vm944, 1, 0
        %v946 = vadd.s32 %v942, %v938
        %v947 = vadd.s32 %v943, %v945
        %v948 = vadd.s32 %v947, %v937
        %v949 = vadd.s32 %v948, %v939
        %v950 = vand.u32 %v927, 65535
        %v951 = vshrl.u32 %v927, 16
        %v952 = vand.u32 %v922, 65535
        %v953 = vshrl.u32 %v922, 16
        %v954 = vmul.u32 %v950, %v952
        %v955 = vmul.u32 %v950, %v953
        %v956 = vmul.u32 %v951, %v952
        %v957 = vmul.u32 %v951, %v953
        %v958 = vshll.u32 %v955, 16
        %v959 = vshrl.u32 %v955, 16
        %v960 = vshll.u32 %v956, 16
        %v961 = vshrl.u32 %v956, 16
        %vm962 = vc.u32 %v954, %v958
        %v963 = vsel %vm962, 1, 0
        %v964 = vadd.s32 %v954, %v958
        %v965 = vadd.s32 %v957, %v963
        %vm966 = vc.u32 %v964, %v960
        %v967 = vsel %vm966, 1, 0
        %v968 = vadd.s32 %v964, %v960
        %v969 = vadd.s32 %v965, %v967
        %v970 = vadd.s32 %v969, %v959
        %v971 = vadd.s32 %v970, %v961
        %v972 = vmul.u32 %v927, %v918
        %v973 = vadd.s32 %v949, %v968
        %vm974 = vc.u32 %v949, %v968
        %v975 = vadd.s32 %v971, 1
        %v976 = vsel %vm974, %v975, %v971
        %v977 = vadd.s32 %v972, %v976
        %v978 = vadd.s32 %v977, 536870912
        %v979 = vshrl.u32 %v978, 30
        %v980 = vshll.u32 %v979, 30
        %v981 = vsub.s32 %v977, %v980
        %vm982 = vcmp.lt.s32.totalorder %v981, 0
        %v983 = vsub.s32 0, %v981
        %v984 = vsel %vm982, %v983, %v981
        %v985 = vclz %v984
        %v986 = vsub.s32 %v985, 2
        %vm987 = vcmp.gt.s32.totalorder 0, %v986
        %v988 = vsel %vm987, 0, %v986
        %v989 = vsub.s32 32, %v988
        %v990 = vshll.u32 %v981, %v988
        %v991 = vshrl.u32 %v973, %v989
        %v992 = vor.u32 %v990, %v991
        %v993 = vsub.s32 4294967266, %v988
        %v994 = vadd.s32 %v993, 127
        %v995 = vshll.u32 %v994, 23
        %v996 = vor.u32 4788187, %v995
        %v997 = vand.u32 2147483647, %v996
        %v999 = vcvt.s32.f32 %v992
        %v1000 = vmul.f32 %v999, %v997
        %v1001 = vxor.u32 %v1000, 2147483648
        %v1002 = vsel %vm881, %v1001, %v1000
        %v1003 = vsub.s32 4, %v979
        %v1004 = vsel %vm881, %v1003, %v979
        %v1005 = vsel %vm880, %v878, %v1002
        %v1006 = vsel %vm880, 0, %v1004
        %v1007 = vmul.f32 %v1005, %v1005
        %v1008 = vmul.f32 %v1007, -0.001358992
        %v1009 = vadd.f32 %v1008, 0.041655596
        %v1010 = vmul.f32 %v1007, %v1009
        %v1011 = vadd.f32 %v1010, -0.4999988
        %v1012 = vmul.f32 %v1007, %v1011
        %v1013 = vadd.f32 1.0, %v1012
        %v1014 = vmul.f32 %v1005, %v1005
        %v1015 = vmul.f32 %v1014, -0.00019511016
        %v1016 = vadd.f32 %v1015, 0.008332121
        %v1017 = vmul.f32 %v1014, %v1016
        %v1018 = vadd.f32 %v1017, -0.16666654
        %v1019 = vmul.f32 %v1014, %v1018
        %v1020 = vadd.f32 %v1019, 1.0
        %v1021 = vmul.f32 %v1020, %v1005
        %vm1022 = vweird.f32 %v878
        %v1023 = vadd.s32 %v1006, 3
        %v1024 = vand.u32 %v1023, 3
        %vm1025 = vcmp.lt.s32.totalorder %v1024, 2
        %vm1026 = vcmp.eq.s32.totalorder %v1024, 0
        %v1027 = vxor.u32 %v1021, 2147483648
        %v1028 = vsel %vm1026, %v1013, %v1027
        %vm1029 = vcmp.eq.s32.totalorder %v1024, 2
        %v1030 = vxor.u32 %v1013, 2147483648
        %v1031 = vsel %vm1029, %v1030, %v1021
        %v1032 = vsel %vm1025, %v1028, %v1031
        %v1033 = vsel %vm1022, nan, %v1032
        %v1034 = vmul.f32 %v235, %v1033
        %v1035 = vsub.f32 %v878, %v1034
        %v1036 = vsub.f32 %v1035, %v231
        %v1037 = vand.u32 2147483647, %v878
        %vm1038 = vcmp.le.f32.partialorder %v1037, 0.7853982
        %vm1039 = vcmp.lt.s32.totalorder %v878, 0
        %v1040 = vand.u32 %v878, 2139095040
        %v1041 = vshrl.u32 %v1040, 23
        %v1042 = vsub.s32 %v1041, 127
        %v1043 = vand.u32 2147483647, %v878
        %v1044 = vand.u32 %v1043, 8388607
        %v1045 = vor.u32 %v1044, 8388608
        %v1046 = vsub.s32 0, %v1045
        %v1047 = vadd.s32 %v1042, 1
        %vm1048 = vcmp.gt.s32.totalorder %v1047, 0
        %v1049 = vsel %vm1048, %v1047, 0
        %v1050 = vshrl.u32 %v1049, 5
        %v1051 = vand.u32 %v1049, 31
        %v1052 = vsub.s32 32, %v1051
        %v1053 = vshrl.u32 683565275, %v1052
        %v1054 = vshll.u32 683565275, %v1051
        %v1055 = vshrl.u32 2475754826, %v1052
        %v1056 = vor.u32 %v1054, %v1055
        %v1057 = vshll.u32 2475754826, %v1051
        %v1058 = vshrl.u32 2131351028, %v1052
        %v1059 = vor.u32 %v1057, %v1058
        %v1060 = vshll.u32 2131351028, %v1051
        %v1061 = vshrl.u32 2102212464, %v1052
        %v1062 = vor.u32 %v1060, %v1061
        %v1063 = vshll.u32 2102212464, %v1051
        %v1064 = vshrl.u32 920167782, %v1052
        %v1065 = vor.u32 %v1063, %v1064
        %v1066 = vshll.u32 920167782, %v1051
        %v1067 = vshrl.u32 1326507024, %v1052
        %v1068 = vor.u32 %v1066, %v1067
        %vm1069 = vcmp.lt.s32.totalorder %v1050, 1
        %vm1070 = vcmp.lt.s32.totalorder %v1050, 2
        %vm1071 = vcmp.lt.s32.totalorder %v1050, 3
        %vm1072 = vcmp.lt.s32.totalorder %v1050, 4
        %v1073 = vsel %vm1069, %v1053, %v1056
        %v1074 = vsel %vm1072, %v1062, 2102212464
        %v1075 = vsel %vm1071, %v1059, %v1074
        %v1076 = vsel %vm1070, %v1073, %v1075
        %v1077 = vsel %vm1069, %v1056, %v1059
        %v1078 = vsel %vm1072, %v1065, 920167782
        %v1079 = vsel %vm1071, %v1062, %v1078
        %v1080 = vsel %vm1070, %v1077, %v1079
        %v1081 = vsel %vm1069, %v1059, %v1062
        %v1082 = vsel %vm1072, %v1068, 1326507024
        %v1083 = vsel %vm1071, %v1065, %v1082
        %v1084 = vsel %vm1070, %v1081, %v1083
        %v1085 = vshll.u32 %v1045, 8
        %v1086 = vand.u32 %v1085, 65535
        %v1087 = vshrl.u32 %v1085, 16
        %v1088 = vand.u32 %v1084, 65535
        %v1089 = vshrl.u32 %v1084, 16
        %v1090 = vmul.u32 %v1086, %v1088
        %v1091 = vmul.u32 %v1086, %v1089
        %v1092 = vmul.u32 %v1087, %v1088
        %v1093 = vmul.u32 %v1087, %v1089
        %v1094 = vshll.u32 %v1091, 16
        %v1095 = vshrl.u32 %v1091, 16
        %v1096 = vshll.u32 %v1092, 16
        %v1097 = vshrl.u32 %v1092, 16
        %vm1098 = vc.u32 %v1090, %v1094
        %v1099 = vsel %vm1098, 1, 0
        %v1100 = vadd.s32 %v1090, %v1094
        %v1101 = vadd.s32 %v1093, %v1099
        %vm1102 = vc.u32 %v1100, %v1096
        %v1103 = vsel %vm1102, 1, 0
        %v1104 = vadd.s32 %v1100, %v1096
        %v1105 = vadd.s32 %v1101, %v1103
        %v1106 = vadd.s32 %v1105, %v1095
        %v1107 = vadd.s32 %v1106, %v1097
        %v1108 = vand.u32 %v1085, 65535
        %v1109 = vshrl.u32 %v1085, 16
        %v1110 = vand.u32 %v1080, 65535
        %v1111 = vshrl.u32 %v1080, 16
        %v1112 = vmul.u32 %v1108, %v1110
        %v1113 = vmul.u32 %v1108, %v1111
        %v1114 = vmul.u32 %v1109, %v1110
        %v1115 = vmul.u32 %v1109, %v1111
        %v1116 = vshll.u32 %v1113, 16
        %v1117 = vshrl.u32 %v1113, 16
        %v1118 = vshll.u32 %v1114, 16
        %v1119 = vshrl.u32 %v1114, 16
        %vm1120 = vc.u32 %v1112, %v1116
        %v1121 = vsel %vm1120, 1, 0
        %v1122 = vadd.s32 %v1112, %v1116
        %v1123 = vadd.s32 %v1115, %v1121
        %vm1124 = vc.u32 %v1122, %v1118
        %v1125 = vsel %vm1124, 1, 0
        %v1126 = vadd.s32 %v1122, %v1118
        %v1127 = vadd.s32 %v1123, %v1125
        %v1128 = vadd.s32 %v1127, %v1117
        %v1129 = vadd.s32 %v1128, %v1119
        %v1130 = vmul.u32 %v1085, %v1076
        %v1131 = vadd.s32 %v1107, %v1126
        %vm1132 = vc.u32 %v1107, %v1126
        %v1133 = vadd.s32 %v1129, 1
        %v1134 = vsel %vm1132, %v1133, %v1129
        %v1135 = vadd.s32 %v1130, %v1134
        %v1136 = vadd.s32 %v1135, 536870912
        %v1137 = vshrl.u32 %v1136, 30
        %v1138 = vshll.u32 %v1137, 30
        %v1139 = vsub.s32 %v1135, %v1138
        %vm1140 = vcmp.lt.s32.totalorder %v1139, 0
        %v1141 = vsub.s32 0, %v1139
        %v1142 = vsel %vm1140, %v1141, %v1139
        %v1143 = vclz %v1142
        %v1144 = vsub.s32 %v1143, 2
        %vm1145 = vcmp.gt.s32.totalorder 0, %v1144
        %v1146 = vsel %vm1145, 0, %v1144
        %v1147 = vsub.s32 32, %v1146
        %v1148 = vshll.u32 %v1139, %v1146
        %v1149 = vshrl.u32 %v1131, %v1147
        %v1150 = vor.u32 %v1148, %v1149
        %v1151 = vsub.s32 4294967266, %v1146
        %v1152 = vadd.s32 %v1151, 127
        %v1153 = vshll.u32 %v1152, 23
        %v1154 = vor.u32 4788187, %v1153
        %v1155 = vand.u32 2147483647, %v1154
        %v1157 = vcvt.s32.f32 %v1150
        %v1158 = vmul.f32 %v1157, %v1155
        %v1159 = vxor.u32 %v1158, 2147483648
        %v1160 = vsel %vm1039, %v1159, %v1158
        %v1161 = vsub.s32 4, %v1137
        %v1162 = vsel %vm1039, %v1161, %v1137
        %v1163 = vsel %vm1038, %v878, %v1160
        %v1164 = vsel %vm1038, 0, %v1162
        %v1165 = vmul.f32 %v1163, %v1163
        %v1166 = vmul.f32 %v1165, -0.001358992
        %v1167 = vadd.f32 %v1166, 0.041655596
        %v1168 = vmul.f32 %v1165, %v1167
        %v1169 = vadd.f32 %v1168, -0.4999988
        %v1170 = vmul.f32 %v1165, %v1169
        %v1171 = vadd.f32 1.0, %v1170
        %v1172 = vmul.f32 %v1163, %v1163
        %v1173 = vmul.f32 %v1172, -0.00019511016
        %v1174 = vadd.f32 %v1173, 0.008332121
        %v1175 = vmul.f32 %v1172, %v1174
        %v1176 = vadd.f32 %v1175, -0.16666654
        %v1177 = vmul.f32 %v1172, %v1176
        %v1178 = vadd.f32 %v1177, 1.0
        %v1179 = vmul.f32 %v1178, %v1163
        %vm1180 = vweird.f32 %v878
        %v1181 = vand.u32 %v1164, 3
        %vm1182 = vcmp.lt.s32.totalorder %v1181, 2
        %vm1183 = vcmp.eq.s32.totalorder %v1181, 0
        %v1184 = vxor.u32 %v1179, 2147483648
        %v1185 = vsel %vm1183, %v1171, %v1184
        %vm1186 = vcmp.eq.s32.totalorder %v1181, 2
        %v1187 = vxor.u32 %v1171, 2147483648
        %v1188 = vsel %vm1186, %v1187, %v1179
        %v1189 = vsel %vm1182, %v1185, %v1188
        %v1190 = vsel %vm1180, nan, %v1189
        %v1191 = vmul.f32 %v235, %v1190
        %v1192 = vsub.f32 1.0, %v1191
        %v1193 = vrcp.pop %v1192
        %v1194 = vmul.f32 %v1036, %v1193
        %v1195 = vsub.f32 %v878, %v1194
        %v1196 = vand.u32 2147483647, %v1195
        %vm1197 = vcmp.le.f32.partialorder %v1196, 0.7853982
        %vm1198 = vcmp.lt.s32.totalorder %v1195, 0
        %v1199 = vand.u32 %v1195, 2139095040
        %v1200 = vshrl.u32 %v1199, 23
        %v1201 = vsub.s32 %v1200, 127
        %v1202 = vand.u32 2147483647, %v1195
        %v1203 = vand.u32 %v1202, 8388607
        %v1204 = vor.u32 %v1203, 8388608
        %v1205 = vsub.s32 0, %v1204
        %v1206 = vadd.s32 %v1201, 1
        %vm1207 = vcmp.gt.s32.totalorder %v1206, 0
        %v1208 = vsel %vm1207, %v1206, 0
        %v1209 = vshrl.u32 %v1208, 5
        %v1210 = vand.u32 %v1208, 31
        %v1211 = vsub.s32 32, %v1210
        %v1212 = vshrl.u32 683565275, %v1211
        %v1213 = vshll.u32 683565275, %v1210
        %v1214 = vshrl.u32 2475754826, %v1211
        %v1215 = vor.u32 %v1213, %v1214
        %v1216 = vshll.u32 2475754826, %v1210
        %v1217 = vshrl.u32 2131351028, %v1211
        %v1218 = vor.u32 %v1216, %v1217
        %v1219 = vshll.u32 2131351028, %v1210
        %v1220 = vshrl.u32 2102212464, %v1211
        %v1221 = vor.u32 %v1219, %v1220
        %v1222 = vshll.u32 2102212464, %v1210
        %v1223 = vshrl.u32 920167782, %v1211
        %v1224 = vor.u32 %v1222, %v1223
        %v1225 = vshll.u32 920167782, %v1210
        %v1226 = vshrl.u32 1326507024, %v1211
        %v1227 = vor.u32 %v1225, %v1226
        %vm1228 = vcmp.lt.s32.totalorder %v1209, 1
        %vm1229 = vcmp.lt.s32.totalorder %v1209, 2
        %vm1230 = vcmp.lt.s32.totalorder %v1209, 3
        %vm1231 = vcmp.lt.s32.totalorder %v1209, 4
        %v1232 = vsel %vm1228, %v1212, %v1215
        %v1233 = vsel %vm1231, %v1221, 2102212464
        %v1234 = vsel %vm1230, %v1218, %v1233
        %v1235 = vsel %vm1229, %v1232, %v1234
        %v1236 = vsel %vm1228, %v1215, %v1218
        %v1237 = vsel %vm1231, %v1224, 920167782
        %v1238 = vsel %vm1230, %v1221, %v1237
        %v1239 = vsel %vm1229, %v1236, %v1238
        %v1240 = vsel %vm1228, %v1218, %v1221
        %v1241 = vsel %vm1231, %v1227, 1326507024
        %v1242 = vsel %vm1230, %v1224, %v1241
        %v1243 = vsel %vm1229, %v1240, %v1242
        %v1244 = vshll.u32 %v1204, 8
        %v1245 = vand.u32 %v1244, 65535
        %v1246 = vshrl.u32 %v1244, 16
        %v1247 = vand.u32 %v1243, 65535
        %v1248 = vshrl.u32 %v1243, 16
        %v1249 = vmul.u32 %v1245, %v1247
        %v1250 = vmul.u32 %v1245, %v1248
        %v1251 = vmul.u32 %v1246, %v1247
        %v1252 = vmul.u32 %v1246, %v1248
        %v1253 = vshll.u32 %v1250, 16
        %v1254 = vshrl.u32 %v1250, 16
        %v1255 = vshll.u32 %v1251, 16
        %v1256 = vshrl.u32 %v1251, 16
        %vm1257 = vc.u32 %v1249, %v1253
        %v1258 = vsel %vm1257, 1, 0
        %v1259 = vadd.s32 %v1249, %v1253
        %v1260 = vadd.s32 %v1252, %v1258
        %vm1261 = vc.u32 %v1259, %v1255
        %v1262 = vsel %vm1261, 1, 0
        %v1263 = vadd.s32 %v1259, %v1255
        %v1264 = vadd.s32 %v1260, %v1262
        %v1265 = vadd.s32 %v1264, %v1254
        %v1266 = vadd.s32 %v1265, %v1256
        %v1267 = vand.u32 %v1244, 65535
        %v1268 = vshrl.u32 %v1244, 16
        %v1269 = vand.u32 %v1239, 65535
        %v1270 = vshrl.u32 %v1239, 16
        %v1271 = vmul.u32 %v1267, %v1269
        %v1272 = vmul.u32 %v1267, %v1270
        %v1273 = vmul.u32 %v1268, %v1269
        %v1274 = vmul.u32 %v1268, %v1270
        %v1275 = vshll.u32 %v1272, 16
        %v1276 = vshrl.u32 %v1272, 16
        %v1277 = vshll.u32 %v1273, 16
        %v1278 = vshrl.u32 %v1273, 16
        %vm1279 = vc.u32 %v1271, %v1275
        %v1280 = vsel %vm1279, 1, 0
        %v1281 = vadd.s32 %v1271, %v1275
        %v1282 = vadd.s32 %v1274, %v1280
        %vm1283 = vc.u32 %v1281, %v1277
        %v1284 = vsel %vm1283, 1, 0
        %v1285 = vadd.s32 %v1281, %v1277
        %v1286 = vadd.s32 %v1282, %v1284
        %v1287 = vadd.s32 %v1286, %v1276
        %v1288 = vadd.s32 %v1287, %v1278
        %v1289 = vmul.u32 %v1244, %v1235
        %v1290 = vadd.s32 %v1266, %v1285
        %vm1291 = vc.u32 %v1266, %v1285
        %v1292 = vadd.s32 %v1288, 1
        %v1293 = vsel %vm1291, %v1292, %v1288
        %v1294 = vadd.s32 %v1289, %v1293
        %v1295 = vadd.s32 %v1294, 536870912
        %v1296 = vshrl.u32 %v1295, 30
        %v1297 = vshll.u32 %v1296, 30
        %v1298 = vsub.s32 %v1294, %v1297
        %vm1299 = vcmp.lt.s32.totalorder %v1298, 0
        %v1300 = vsub.s32 0, %v1298
        %v1301 = vsel %vm1299, %v1300, %v1298
        %v1302 = vclz %v1301
        %v1303 = vsub.s32 %v1302, 2
        %vm1304 = vcmp.gt.s32.totalorder 0, %v1303
        %v1305 = vsel %vm1304, 0, %v1303
        %v1306 = vsub.s32 32, %v1305
        %v1307 = vshll.u32 %v1298, %v1305
        %v1308 = vshrl.u32 %v1290, %v1306
        %v1309 = vor.u32 %v1307, %v1308
        %v1310 = vsub.s32 4294967266, %v1305
        %v1311 = vadd.s32 %v1310, 127
        %v1312 = vshll.u32 %v1311, 23
        %v1313 = vor.u32 4788187, %v1312
        %v1314 = vand.u32 2147483647, %v1313
        %v1316 = vcvt.s32.f32 %v1309
        %v1317 = vmul.f32 %v1316, %v1314
        %v1318 = vxor.u32 %v1317, 2147483648
        %v1319 = vsel %vm1198, %v1318, %v1317
        %v1320 = vsub.s32 4, %v1296
        %v1321 = vsel %vm1198, %v1320, %v1296
        %v1322 = vsel %vm1197, %v1195, %v1319
        %v1323 = vsel %vm1197, 0, %v1321
        %v1324 = vmul.f32 %v1322, %v1322
        %v1325 = vmul.f32 %v1324, -0.001358992
        %v1326 = vadd.f32 %v1325, 0.041655596
        %v1327 = vmul.f32 %v1324, %v1326
        %v1328 = vadd.f32 %v1327, -0.4999988
        %v1329 = vmul.f32 %v1324, %v1328
        %v1330 = vadd.f32 1.0, %v1329
        %v1331 = vmul.f32 %v1322, %v1322
        %v1332 = vmul.f32 %v1331, -0.00019511016
        %v1333 = vadd.f32 %v1332, 0.008332121
        %v1334 = vmul.f32 %v1331, %v1333
        %v1335 = vadd.f32 %v1334, -0.16666654
        %v1336 = vmul.f32 %v1331, %v1335
        %v1337 = vadd.f32 %v1336, 1.0
        %v1338 = vmul.f32 %v1337, %v1322
        %vm1339 = vweird.f32 %v1195
        %v1340 = vadd.s32 %v1323, 3
        %v1341 = vand.u32 %v1340, 3
        %vm1342 = vcmp.lt.s32.totalorder %v1341, 2
        %vm1343 = vcmp.eq.s32.totalorder %v1341, 0
        %v1344 = vxor.u32 %v1338, 2147483648
        %v1345 = vsel %vm1343, %v1330, %v1344
        %vm1346 = vcmp.eq.s32.totalorder %v1341, 2
        %v1347 = vxor.u32 %v1330, 2147483648
        %v1348 = vsel %vm1346, %v1347, %v1338
        %v1349 = vsel %vm1342, %v1345, %v1348
        %v1350 = vsel %vm1339, nan, %v1349
        %v1351 = vmul.f32 %v235, %v1350
        %v1352 = vsub.f32 %v1195, %v1351
        %v1353 = vsub.f32 %v1352, %v231
        %v1354 = vand.u32 2147483647, %v1195
        %vm1355 = vcmp.le.f32.partialorder %v1354, 0.7853982
        %vm1356 = vcmp.lt.s32.totalorder %v1195, 0
        %v1357 = vand.u32 %v1195, 2139095040
        %v1358 = vshrl.u32 %v1357, 23
        %v1359 = vsub.s32 %v1358, 127
        %v1360 = vand.u32 2147483647, %v1195
        %v1361 = vand.u32 %v1360, 8388607
        %v1362 = vor.u32 %v1361, 8388608
        %v1363 = vsub.s32 0, %v1362
        %v1364 = vadd.s32 %v1359, 1
        %vm1365 = vcmp.gt.s32.totalorder %v1364, 0
        %v1366 = vsel %vm1365, %v1364, 0
        %v1367 = vshrl.u32 %v1366, 5
        %v1368 = vand.u32 %v1366, 31
        %v1369 = vsub.s32 32, %v1368
        %v1370 = vshrl.u32 683565275, %v1369
        %v1371 = vshll.u32 683565275, %v1368
        %v1372 = vshrl.u32 2475754826, %v1369
        %v1373 = vor.u32 %v1371, %v1372
        %v1374 = vshll.u32 2475754826, %v1368
        %v1375 = vshrl.u32 2131351028, %v1369
        %v1376 = vor.u32 %v1374, %v1375
        %v1377 = vshll.u32 2131351028, %v1368
        %v1378 = vshrl.u32 2102212464, %v1369
        %v1379 = vor.u32 %v1377, %v1378
        %v1380 = vshll.u32 2102212464, %v1368
        %v1381 = vshrl.u32 920167782, %v1369
        %v1382 = vor.u32 %v1380, %v1381
        %v1383 = vshll.u32 920167782, %v1368
        %v1384 = vshrl.u32 1326507024, %v1369
        %v1385 = vor.u32 %v1383, %v1384
        %vm1386 = vcmp.lt.s32.totalorder %v1367, 1
        %vm1387 = vcmp.lt.s32.totalorder %v1367, 2
        %vm1388 = vcmp.lt.s32.totalorder %v1367, 3
        %vm1389 = vcmp.lt.s32.totalorder %v1367, 4
        %v1390 = vsel %vm1386, %v1370, %v1373
        %v1391 = vsel %vm1389, %v1379, 2102212464
        %v1392 = vsel %vm1388, %v1376, %v1391
        %v1393 = vsel %vm1387, %v1390, %v1392
        %v1394 = vsel %vm1386, %v1373, %v1376
        %v1395 = vsel %vm1389, %v1382, 920167782
        %v1396 = vsel %vm1388, %v1379, %v1395
        %v1397 = vsel %vm1387, %v1394, %v1396
        %v1398 = vsel %vm1386, %v1376, %v1379
        %v1399 = vsel %vm1389, %v1385, 1326507024
        %v1400 = vsel %vm1388, %v1382, %v1399
        %v1401 = vsel %vm1387, %v1398, %v1400
        %v1402 = vshll.u32 %v1362, 8
        %v1403 = vand.u32 %v1402, 65535
        %v1404 = vshrl.u32 %v1402, 16
        %v1405 = vand.u32 %v1401, 65535
        %v1406 = vshrl.u32 %v1401, 16
        %v1407 = vmul.u32 %v1403, %v1405
        %v1408 = vmul.u32 %v1403, %v1406
        %v1409 = vmul.u32 %v1404, %v1405
        %v1410 = vmul.u32 %v1404, %v1406
        %v1411 = vshll.u32 %v1408, 16
        %v1412 = vshrl.u32 %v1408, 16
        %v1413 = vshll.u32 %v1409, 16
        %v1414 = vshrl.u32 %v1409, 16
        %vm1415 = vc.u32 %v1407, %v1411
        %v1416 = vsel %vm1415, 1, 0
        %v1417 = vadd.s32 %v1407, %v1411
        %v1418 = vadd.s32 %v1410, %v1416
        %vm1419 = vc.u32 %v1417, %v1413
        %v1420 = vsel %vm1419, 1, 0
        %v1421 = vadd.s32 %v1417, %v1413
        %v1422 = vadd.s32 %v1418, %v1420
        %v1423 = vadd.s32 %v1422, %v1412
        %v1424 = vadd.s32 %v1423, %v1414
        %v1425 = vand.u32 %v1402, 65535
        %v1426 = vshrl.u32 %v1402, 16
        %v1427 = vand.u32 %v1397, 65535
        %v1428 = vshrl.u32 %v1397, 16
        %v1429 = vmul.u32 %v1425, %v1427
        %v1430 = vmul.u32 %v1425, %v1428
        %v1431 = vmul.u32 %v1426, %v1427
        %v1432 = vmul.u32 %v1426, %v1428
        %v1433 = vshll.u32 %v1430, 16
        %v1434 = vshrl.u32 %v1430, 16
        %v1435 = vshll.u32 %v1431, 16
        %v1436 = vshrl.u32 %v1431, 16
        %vm1437 = vc.u32 %v1429, %v1433
        %v1438 = vsel %vm1437, 1, 0
        %v1439 = vadd.s32 %v1429, %v1433
        %v1440 = vadd.s32 %v1432, %v1438
        %vm1441 = vc.u32 %v1439, %v1435
        %v1442 = vsel %vm1441, 1, 0
        %v1443 = vadd.s32 %v1439, %v1435
        %v1444 = vadd.s32 %v1440, %v1442
        %v1445 = vadd.s32 %v1444, %v1434
        %v1446 = vadd.s32 %v1445, %v1436
        %v1447 = vmul.u32 %v1402, %v1393
        %v1448 = vadd.s32 %v1424, %v1443
        %vm1449 = vc.u32 %v1424, %v1443
        %v1450 = vadd.s32 %v1446, 1
        %v1451 = vsel %vm1449, %v1450, %v1446
        %v1452 = vadd.s32 %v1447, %v1451
        %v1453 = vadd.s32 %v1452, 536870912
        %v1454 = vshrl.u32 %v1453, 30
        %v1455 = vshll.u32 %v1454, 30
        %v1456 = vsub.s32 %v1452, %v1455
        %vm1457 = vcmp.lt.s32.totalorder %v1456, 0
        %v1458 = vsub.s32 0, %v1456
        %v1459 = vsel %vm1457, %v1458, %v1456
        %v1460 = vclz %v1459
        %v1461 = vsub.s32 %v1460, 2
        %vm1462 = vcmp.gt.s32.totalorder 0, %v1461
        %v1463 = vsel %vm1462, 0, %v1461
        %v1464 = vsub.s32 32, %v1463
        %v1465 = vshll.u32 %v1456, %v1463
        %v1466 = vshrl.u32 %v1448, %v1464
        %v1467 = vor.u32 %v1465, %v1466
        %v1468 = vsub.s32 4294967266, %v1463
        %v1469 = vadd.s32 %v1468, 127
        %v1470 = vshll.u32 %v1469, 23
        %v1471 = vor.u32 4788187, %v1470
        %v1472 = vand.u32 2147483647, %v1471
        %v1474 = vcvt.s32.f32 %v1467
        %v1475 = vmul.f32 %v1474, %v1472
        %v1476 = vxor.u32 %v1475, 2147483648
        %v1477 = vsel %vm1356, %v1476, %v1475
        %v1478 = vsub.s32 4, %v1454
        %v1479 = vsel %vm1356, %v1478, %v1454
        %v1480 = vsel %vm1355, %v1195, %v1477
        %v1481 = vsel %vm1355, 0, %v1479
        %v1482 = vmul.f32 %v1480, %v1480
        %v1483 = vmul.f32 %v1482, -0.001358992
        %v1484 = vadd.f32 %v1483, 0.041655596
        %v1485 = vmul.f32 %v1482, %v1484
        %v1486 = vadd.f32 %v1485, -0.4999988
        %v1487 = vmul.f32 %v1482, %v1486
        %v1488 = vadd.f32 1.0, %v1487
        %v1489 = vmul.f32 %v1480, %v1480
        %v1490 = vmul.f32 %v1489, -0.00019511016
        %v1491 = vadd.f32 %v1490, 0.008332121
        %v1492 = vmul.f32 %v1489, %v1491
        %v1493 = vadd.f32 %v1492, -0.16666654
        %v1494 = vmul.f32 %v1489, %v1493
        %v1495 = vadd.f32 %v1494, 1.0
        %v1496 = vmul.f32 %v1495, %v1480
        %vm1497 = vweird.f32 %v1195
        %v1498 = vand.u32 %v1481, 3
        %vm1499 = vcmp.lt.s32.totalorder %v1498, 2
        %vm1500 = vcmp.eq.s32.totalorder %v1498, 0
        %v1501 = vxor.u32 %v1496, 2147483648
        %v1502 = vsel %vm1500, %v1488, %v1501
        %vm1503 = vcmp.eq.s32.totalorder %v1498, 2
        %v1504 = vxor.u32 %v1488, 2147483648
        %v1505 = vsel %vm1503, %v1504, %v1496
        %v1506 = vsel %vm1499, %v1502, %v1505
        %v1507 = vsel %vm1497, nan, %v1506
        %v1508 = vmul.f32 %v235, %v1507
        %v1509 = vsub.f32 1.0, %v1508
        %v1510 = vrcp.pop %v1509
        %v1511 = vmul.f32 %v1353, %v1510
        %v1512 = vsub.f32 %v1195, %v1511
        %v1513 = vand.u32 2147483647, %v1512
        %vm1514 = vcmp.le.f32.partialorder %v1513, 0.7853982
        %vm1515 = vcmp.lt.s32.totalorder %v1512, 0
        %v1516 = vand.u32 %v1512, 2139095040
        %v1517 = vshrl.u32 %v1516, 23
        %v1518 = vsub.s32 %v1517, 127
        %v1519 = vand.u32 2147483647, %v1512
        %v1520 = vand.u32 %v1519, 8388607
        %v1521 = vor.u32 %v1520, 8388608
        %v1522 = vsub.s32 0, %v1521
        %v1523 = vadd.s32 %v1518, 1
        %vm1524 = vcmp.gt.s32.totalorder %v1523, 0
        %v1525 = vsel %vm1524, %v1523, 0
        %v1526 = vshrl.u32 %v1525, 5
        %v1527 = vand.u32 %v1525, 31
        %v1528 = vsub.s32 32, %v1527
        %v1529 = vshrl.u32 683565275, %v1528
        %v1530 = vshll.u32 683565275, %v1527
        %v1531 = vshrl.u32 2475754826, %v1528
        %v1532 = vor.u32 %v1530, %v1531
        %v1533 = vshll.u32 2475754826, %v1527
        %v1534 = vshrl.u32 2131351028, %v1528
        %v1535 = vor.u32 %v1533, %v1534
        %v1536 = vshll.u32 2131351028, %v1527
        %v1537 = vshrl.u32 2102212464, %v1528
        %v1538 = vor.u32 %v1536, %v1537
        %v1539 = vshll.u32 2102212464, %v1527
        %v1540 = vshrl.u32 920167782, %v1528
        %v1541 = vor.u32 %v1539, %v1540
        %v1542 = vshll.u32 920167782, %v1527
        %v1543 = vshrl.u32 1326507024, %v1528
        %v1544 = vor.u32 %v1542, %v1543
        %vm1545 = vcmp.lt.s32.totalorder %v1526, 1
        %vm1546 = vcmp.lt.s32.totalorder %v1526, 2
        %vm1547 = vcmp.lt.s32.totalorder %v1526, 3
        %vm1548 = vcmp.lt.s32.totalorder %v1526, 4
        %v1549 = vsel %vm1545, %v1529, %v1532
        %v1550 = vsel %vm1548, %v1538, 2102212464
        %v1551 = vsel %vm1547, %v1535, %v1550
        %v1552 = vsel %vm1546, %v1549, %v1551
        %v1553 = vsel %vm1545, %v1532, %v1535
        %v1554 = vsel %vm1548, %v1541, 920167782
        %v1555 = vsel %vm1547, %v1538, %v1554
        %v1556 = vsel %vm1546, %v1553, %v1555
        %v1557 = vsel %vm1545, %v1535, %v1538
        %v1558 = vsel %vm1548, %v1544, 1326507024
        %v1559 = vsel %vm1547, %v1541, %v1558
        %v1560 = vsel %vm1546, %v1557, %v1559
        %v1561 = vshll.u32 %v1521, 8
        %v1562 = vand.u32 %v1561, 65535
        %v1563 = vshrl.u32 %v1561, 16
        %v1564 = vand.u32 %v1560, 65535
        %v1565 = vshrl.u32 %v1560, 16
        %v1566 = vmul.u32 %v1562, %v1564
        %v1567 = vmul.u32 %v1562, %v1565
        %v1568 = vmul.u32 %v1563, %v1564
        %v1569 = vmul.u32 %v1563, %v1565
        %v1570 = vshll.u32 %v1567, 16
        %v1571 = vshrl.u32 %v1567, 16
        %v1572 = vshll.u32 %v1568, 16
        %v1573 = vshrl.u32 %v1568, 16
        %vm1574 = vc.u32 %v1566, %v1570
        %v1575 = vsel %vm1574, 1, 0
        %v1576 = vadd.s32 %v1566, %v1570
        %v1577 = vadd.s32 %v1569, %v1575
        %vm1578 = vc.u32 %v1576, %v1572
        %v1579 = vsel %vm1578, 1, 0
        %v1580 = vadd.s32 %v1576, %v1572
        %v1581 = vadd.s32 %v1577, %v1579
        %v1582 = vadd.s32 %v1581, %v1571
        %v1583 = vadd.s32 %v1582, %v1573
        %v1584 = vand.u32 %v1561, 65535
        %v1585 = vshrl.u32 %v1561, 16
        %v1586 = vand.u32 %v1556, 65535
        %v1587 = vshrl.u32 %v1556, 16
        %v1588 = vmul.u32 %v1584, %v1586
        %v1589 = vmul.u32 %v1584, %v1587
        %v1590 = vmul.u32 %v1585, %v1586
        %v1591 = vmul.u32 %v1585, %v1587
        %v1592 = vshll.u32 %v1589, 16
        %v1593 = vshrl.u32 %v1589, 16
        %v1594 = vshll.u32 %v1590, 16
        %v1595 = vshrl.u32 %v1590, 16
        %vm1596 = vc.u32 %v1588, %v1592
        %v1597 = vsel %vm1596, 1, 0
        %v1598 = vadd.s32 %v1588, %v1592
        %v1599 = vadd.s32 %v1591, %v1597
        %vm1600 = vc.u32 %v1598, %v1594
        %v1601 = vsel %vm1600, 1, 0
        %v1602 = vadd.s32 %v1598, %v1594
        %v1603 = vadd.s32 %v1599, %v1601
        %v1604 = vadd.s32 %v1603, %v1593
        %v1605 = vadd.s32 %v1604, %v1595
        %v1606 = vmul.u32 %v1561, %v1552
        %v1607 = vadd.s32 %v1583, %v1602
        %vm1608 = vc.u32 %v1583, %v1602
        %v1609 = vadd.s32 %v1605, 1
        %v1610 = vsel %vm1608, %v1609, %v1605
        %v1611 = vadd.s32 %v1606, %v1610
        %v1612 = vadd.s32 %v1611, 536870912
        %v1613 = vshrl.u32 %v1612, 30
        %v1614 = vshll.u32 %v1613, 30
        %v1615 = vsub.s32 %v1611, %v1614
        %vm1616 = vcmp.lt.s32.totalorder %v1615, 0
        %v1617 = vsub.s32 0, %v1615
        %v1618 = vsel %vm1616, %v1617, %v1615
        %v1619 = vclz %v1618
        %v1620 = vsub.s32 %v1619, 2
        %vm1621 = vcmp.gt.s32.totalorder 0, %v1620
        %v1622 = vsel %vm1621, 0, %v1620
        %v1623 = vsub.s32 32, %v1622
        %v1624 = vshll.u32 %v1615, %v1622
        %v1625 = vshrl.u32 %v1607, %v1623
        %v1626 = vor.u32 %v1624, %v1625
        %v1627 = vsub.s32 4294967266, %v1622
        %v1628 = vadd.s32 %v1627, 127
        %v1629 = vshll.u32 %v1628, 23
        %v1630 = vor.u32 4788187, %v1629
        %v1631 = vand.u32 2147483647, %v1630
        %v1633 = vcvt.s32.f32 %v1626
        %v1634 = vmul.f32 %v1633, %v1631
        %v1635 = vxor.u32 %v1634, 2147483648
        %v1636 = vsel %vm1515, %v1635, %v1634
        %v1637 = vsub.s32 4, %v1613
        %v1638 = vsel %vm1515, %v1637, %v1613
        %v1639 = vsel %vm1514, %v1512, %v1636
        %v1640 = vsel %vm1514, 0, %v1638
        %v1641 = vmul.f32 %v1639, %v1639
        %v1642 = vmul.f32 %v1641, -0.001358992
        %v1643 = vadd.f32 %v1642, 0.041655596
        %v1644 = vmul.f32 %v1641, %v1643
        %v1645 = vadd.f32 %v1644, -0.4999988
        %v1646 = vmul.f32 %v1641, %v1645
        %v1647 = vadd.f32 1.0, %v1646
        %v1648 = vmul.f32 %v1639, %v1639
        %v1649 = vmul.f32 %v1648, -0.00019511016
        %v1650 = vadd.f32 %v1649, 0.008332121
        %v1651 = vmul.f32 %v1648, %v1650
        %v1652 = vadd.f32 %v1651, -0.16666654
        %v1653 = vmul.f32 %v1648, %v1652
        %v1654 = vadd.f32 %v1653, 1.0
        %v1655 = vmul.f32 %v1654, %v1639
        %vm1656 = vweird.f32 %v1512
        %v1657 = vand.u32 %v1640, 3
        %vm1658 = vcmp.lt.s32.totalorder %v1657, 2
        %vm1659 = vcmp.eq.s32.totalorder %v1657, 0
        %v1660 = vxor.u32 %v1655, 2147483648
        %v1661 = vsel %vm1659, %v1647, %v1660
        %vm1662 = vcmp.eq.s32.totalorder %v1657, 2
        %v1663 = vxor.u32 %v1647, 2147483648
        %v1664 = vsel %vm1662, %v1663, %v1655
        %v1665 = vsel %vm1658, %v1661, %v1664
        %v1666 = vsel %vm1656, nan, %v1665
        %v1667 = vsub.f32 %v1666, %v235
        %v1668 = vmul.f32 %v239, %v1667
        %v1669 = vmul.f32 %v235, %v235
        %v1670 = vsub.f32 1.0, %v1669
        %v1671 = vrsqrt.pop %v1670
        %v1672 = vmul.f32 %v1671, %v1670
        %v1673 = vmul.f32 %v1672, %v1671
        %v1674 = vmul.f32 0.5, %v1673
        %v1675 = vsub.f32 1.5, %v1674
        %v1676 = vmul.f32 %v1671, %v1675
        %v1677 = vmul.f32 %v1670, %v1676
        %vm1678 = vcmp.eq.f32.partialorder %v1670, inf
        %v1679 = vsel %vm1678, %v1670, %v1677
        %vm1680 = vcmp.eq.f32.partialorder %v1670, 0.0
        %v1681 = vand.u32 %v1670, 2147483648
        %v1682 = vsel %vm1680, %v1681, %v1679
        %v1683 = vand.u32 2147483647, %v1512
        %vm1684 = vcmp.le.f32.partialorder %v1683, 0.7853982
        %vm1685 = vcmp.lt.s32.totalorder %v1512, 0
        %v1686 = vand.u32 %v1512, 2139095040
        %v1687 = vshrl.u32 %v1686, 23
        %v1688 = vsub.s32 %v1687, 127
        %v1689 = vand.u32 2147483647, %v1512
        %v1690 = vand.u32 %v1689, 8388607
        %v1691 = vor.u32 %v1690, 8388608
        %v1692 = vsub.s32 0, %v1691
        %v1693 = vadd.s32 %v1688, 1
        %vm1694 = vcmp.gt.s32.totalorder %v1693, 0
        %v1695 = vsel %vm1694, %v1693, 0
        %v1696 = vshrl.u32 %v1695, 5
        %v1697 = vand.u32 %v1695, 31
        %v1698 = vsub.s32 32, %v1697
        %v1699 = vshrl.u32 683565275, %v1698
        %v1700 = vshll.u32 683565275, %v1697
        %v1701 = vshrl.u32 2475754826, %v1698
        %v1702 = vor.u32 %v1700, %v1701
        %v1703 = vshll.u32 2475754826, %v1697
        %v1704 = vshrl.u32 2131351028, %v1698
        %v1705 = vor.u32 %v1703, %v1704
        %v1706 = vshll.u32 2131351028, %v1697
        %v1707 = vshrl.u32 2102212464, %v1698
        %v1708 = vor.u32 %v1706, %v1707
        %v1709 = vshll.u32 2102212464, %v1697
        %v1710 = vshrl.u32 920167782, %v1698
        %v1711 = vor.u32 %v1709, %v1710
        %v1712 = vshll.u32 920167782, %v1697
        %v1713 = vshrl.u32 1326507024, %v1698
        %v1714 = vor.u32 %v1712, %v1713
        %vm1715 = vcmp.lt.s32.totalorder %v1696, 1
        %vm1716 = vcmp.lt.s32.totalorder %v1696, 2
        %vm1717 = vcmp.lt.s32.totalorder %v1696, 3
        %vm1718 = vcmp.lt.s32.totalorder %v1696, 4
        %v1719 = vsel %vm1715, %v1699, %v1702
        %v1720 = vsel %vm1718, %v1708, 2102212464
        %v1721 = vsel %vm1717, %v1705, %v1720
        %v1722 = vsel %vm1716, %v1719, %v1721
        %v1723 = vsel %vm1715, %v1702, %v1705
        %v1724 = vsel %vm1718, %v1711, 920167782
        %v1725 = vsel %vm1717, %v1708, %v1724
        %v1726 = vsel %vm1716, %v1723, %v1725
        %v1727 = vsel %vm1715, %v1705, %v1708
        %v1728 = vsel %vm1718, %v1714, 1326507024
        %v1729 = vsel %vm1717, %v1711, %v1728
        %v1730 = vsel %vm1716, %v1727, %v1729
        %v1731 = vshll.u32 %v1691, 8
        %v1732 = vand.u32 %v1731, 65535
        %v1733 = vshrl.u32 %v1731, 16
        %v1734 = vand.u32 %v1730, 65535
        %v1735 = vshrl.u32 %v1730, 16
        %v1736 = vmul.u32 %v1732, %v1734
        %v1737 = vmul.u32 %v1732, %v1735
        %v1738 = vmul.u32 %v1733, %v1734
        %v1739 = vmul.u32 %v1733, %v1735
        %v1740 = vshll.u32 %v1737, 16
        %v1741 = vshrl.u32 %v1737, 16
        %v1742 = vshll.u32 %v1738, 16
        %v1743 = vshrl.u32 %v1738, 16
        %vm1744 = vc.u32 %v1736, %v1740
        %v1745 = vsel %vm1744, 1, 0
        %v1746 = vadd.s32 %v1736, %v1740
        %v1747 = vadd.s32 %v1739, %v1745
        %vm1748 = vc.u32 %v1746, %v1742
        %v1749 = vsel %vm1748, 1, 0
        %v1750 = vadd.s32 %v1746, %v1742
        %v1751 = vadd.s32 %v1747, %v1749
        %v1752 = vadd.s32 %v1751, %v1741
        %v1753 = vadd.s32 %v1752, %v1743
        %v1754 = vand.u32 %v1731, 65535
        %v1755 = vshrl.u32 %v1731, 16
        %v1756 = vand.u32 %v1726, 65535
        %v1757 = vshrl.u32 %v1726, 16
        %v1758 = vmul.u32 %v1754, %v1756
        %v1759 = vmul.u32 %v1754, %v1757
        %v1760 = vmul.u32 %v1755, %v1756
        %v1761 = vmul.u32 %v1755, %v1757
        %v1762 = vshll.u32 %v1759, 16
        %v1763 = vshrl.u32 %v1759, 16
        %v1764 = vshll.u32 %v1760, 16
        %v1765 = vshrl.u32 %v1760, 16
        %vm1766 = vc.u32 %v1758, %v1762
        %v1767 = vsel %vm1766, 1, 0
        %v1768 = vadd.s32 %v1758, %v1762
        %v1769 = vadd.s32 %v1761, %v1767
        %vm1770 = vc.u32 %v1768, %v1764
        %v1771 = vsel %vm1770, 1, 0
        %v1772 = vadd.s32 %v1768, %v1764
        %v1773 = vadd.s32 %v1769, %v1771
        %v1774 = vadd.s32 %v1773, %v1763
        %v1775 = vadd.s32 %v1774, %v1765
        %v1776 = vmul.u32 %v1731, %v1722
        %v1777 = vadd.s32 %v1753, %v1772
        %vm1778 = vc.u32 %v1753, %v1772
        %v1779 = vadd.s32 %v1775, 1
        %v1780 = vsel %vm1778, %v1779, %v1775
        %v1781 = vadd.s32 %v1776, %v1780
        %v1782 = vadd.s32 %v1781, 536870912
        %v1783 = vshrl.u32 %v1782, 30
        %v1784 = vshll.u32 %v1783, 30
        %v1785 = vsub.s32 %v1781, %v1784
        %vm1786 = vcmp.lt.s32.totalorder %v1785, 0
        %v1787 = vsub.s32 0, %v1785
        %v1788 = vsel %vm1786, %v1787, %v1785
        %v1789 = vclz %v1788
        %v1790 = vsub.s32 %v1789, 2
        %vm1791 = vcmp.gt.s32.totalorder 0, %v1790
        %v1792 = vsel %vm1791, 0, %v1790
        %v1793 = vsub.s32 32, %v1792
        %v1794 = vshll.u32 %v1785, %v1792
        %v1795 = vshrl.u32 %v1777, %v1793
        %v1796 = vor.u32 %v1794, %v1795
        %v1797 = vsub.s32 4294967266, %v1792
        %v1798 = vadd.s32 %v1797, 127
        %v1799 = vshll.u32 %v1798, 23
        %v1800 = vor.u32 4788187, %v1799
        %v1801 = vand.u32 2147483647, %v1800
        %v1803 = vcvt.s32.f32 %v1796
        %v1804 = vmul.f32 %v1803, %v1801
        %v1805 = vxor.u32 %v1804, 2147483648
        %v1806 = vsel %vm1685, %v1805, %v1804
        %v1807 = vsub.s32 4, %v1783
        %v1808 = vsel %vm1685, %v1807, %v1783
        %v1809 = vsel %vm1684, %v1512, %v1806
        %v1810 = vsel %vm1684, 0, %v1808
        %v1811 = vmul.f32 %v1809, %v1809
        %v1812 = vmul.f32 %v1811, -0.001358992
        %v1813 = vadd.f32 %v1812, 0.041655596
        %v1814 = vmul.f32 %v1811, %v1813
        %v1815 = vadd.f32 %v1814, -0.4999988
        %v1816 = vmul.f32 %v1811, %v1815
        %v1817 = vadd.f32 1.0, %v1816
        %v1818 = vmul.f32 %v1809, %v1809
        %v1819 = vmul.f32 %v1818, -0.00019511016
        %v1820 = vadd.f32 %v1819, 0.008332121
        %v1821 = vmul.f32 %v1818, %v1820
        %v1822 = vadd.f32 %v1821, -0.16666654
        %v1823 = vmul.f32 %v1818, %v1822
        %v1824 = vadd.f32 %v1823, 1.0
        %v1825 = vmul.f32 %v1824, %v1809
        %vm1826 = vweird.f32 %v1512
        %v1827 = vadd.s32 %v1810, 3
        %v1828 = vand.u32 %v1827, 3
        %vm1829 = vcmp.lt.s32.totalorder %v1828, 2
        %vm1830 = vcmp.eq.s32.totalorder %v1828, 0
        %v1831 = vxor.u32 %v1825, 2147483648
        %v1832 = vsel %vm1830, %v1817, %v1831
        %vm1833 = vcmp.eq.s32.totalorder %v1828, 2
        %v1834 = vxor.u32 %v1817, 2147483648
        %v1835 = vsel %vm1833, %v1834, %v1825
        %v1836 = vsel %vm1829, %v1832, %v1835
        %v1837 = vsel %vm1826, nan, %v1836
        %v1838 = vmul.f32 %v1682, %v1837
        %v1839 = vmul.f32 %v239, %v1838
        %v1840 = vand.u32 2147483647, %v1668
        %v1841 = vand.u32 2147483647, %v1839
        %v1842 = vmin.f32 %v1840, %v1841
        %v1843 = vmax.f32 %v1840, %v1841
        %v1844 = vrcp.pop %v1843
        %v1845 = vmul.f32 %v1843, %v1844
        %v1846 = vsub.f32 1.0, %v1845
        %v1847 = vmul.f32 %v1844, %v1846
        %v1848 = vadd.f32 %v1844, %v1847
        %vm1849 = vweird.f32 %v1843
        %vm1850 = vweird.f32 %v1844
        %vm1851 = vmor %vm1849, %vm1850
        %v1852 = vsel %vm1851, %v1844, %v1848
        %v1853 = vand.u32 2147483647, %v1843
        %vm1854 = vcmp.eq.f32.partialorder %v1853, 8.507059e+37
        %v1855 = vand.u32 %v1843, 2147483648
        %v1856 = vor.u32 1.1754944e-38, %v1855
        %v1857 = vsel %vm1854, %v1856, %v1852
        %v1858 = vmul.f32 %v1842, %v1857
        %v1859 = vmul.f32 %v1858, %v1858
        %v1860 = vmul.f32 0.002785687, %v1859
        %v1861 = vadd.f32 %v1860, -0.015866
        %v1862 = vmul.f32 %v1861, %v1859
        %v1863 = vadd.f32 %v1862, 0.04247222
        %v1864 = vmul.f32 %v1863, %v1859
        %v1865 = vadd.f32 %v1864, -0.074975304
        %v1866 = vmul.f32 %v1865, %v1859
        %v1867 = vadd.f32 %v1866, 0.1064488
        %v1868 = vmul.f32 %v1867, %v1859
        %v1869 = vadd.f32 %v1868, -0.14207031
        %v1870 = vmul.f32 %v1869, %v1859
        %v1871 = vadd.f32 %v1870, 0.19993454
        %v1872 = vmul.f32 %v1871, %v1859
        %v1873 = vadd.f32 %v1872, -0.33333147
        %v1874 = vmul.f32 %v1873, %v1859
        %v1875 = vmul.f32 %v1874, %v1858
        %v1876 = vadd.f32 %v1875, %v1858
        %vm1877 = vcmp.gt.f32.partialorder %v1841, %v1840
        %v1878 = vsub.f32 1.5707964, %v1876
        %v1879 = vsel %vm1877, %v1878, %v1876
        %vm1880 = vcmp.lt.f32.partialorder %v1668, 0.0
        %v1881 = vsub.f32 3.1415927, %v1879
        %v1882 = vsel %vm1880, %v1881, %v1879
        %vm1883 = vcmp.lt.s32.totalorder %v1668, 0
        %v1884 = vsel %vm1883, 3.1415927, 0.0
        %vm1885 = vcmp.eq.f32.partialorder %v1839, 0.0
        %v1886 = vsel %vm1885, %v1884, %v1882
        %vm1887 = vcmp.ne.f32.partialorder %v1668, %v1668
        %vm1888 = vcmp.ne.f32.partialorder %v1839, %v1839
        %vm1889 = vmor %vm1887, %vm1888
        %v1890 = vsel %vm1889, nan, %v1886
        %vm1891 = vcmp.lt.f32.partialorder %v1668, 0.0
        %v1892 = vsel %vm1891, 2.3561945, 0.7853982
        %vm1893 = vcmp.eq.s32.totalorder %v1840, inf
        %vm1894 = vcmp.eq.s32.totalorder %v1841, inf
        %vm1895 = vmand %vm1893, %vm1894
        %v1896 = vsel %vm1895, %v1892, %v1890
        %v1897 = vand.u32 2147483647, %v1896
        %v1898 = vand.u32 %v1839, 2147483648
        %v1899 = vor.u32 %v1897, %v1898
        %v1900 = vmul.f32 %v239, %v1899
        %v1901 = vmul.f32 %v1668, %v1668
        %v1902 = vmul.f32 %v1839, %v1839
        %v1903 = vadd.f32 %v1901, %v1902
        %v1904 = vrsqrt.pop %v1903
        %v1905 = vmul.f32 %v1904, %v1903
        %v1906 = vmul.f32 %v1905, %v1904
        %v1907 = vmul.f32 0.5, %v1906
        %v1908 = vsub.f32 1.5, %v1907
        %v1909 = vmul.f32 %v1904, %v1908
        %v1910 = vmul.f32 %v1903, %v1909
        %vm1911 = vcmp.eq.f32.partialorder %v1903, inf
        %v1912 = vsel %vm1911, %v1903, %v1910
        %vm1913 = vcmp.eq.f32.partialorder %v1903, 0.0
        %v1914 = vand.u32 %v1903, 2147483648
        %v1915 = vsel %vm1913, %v1914, %v1912
        %v1916 = vadd.f32 %v1900, %v247
        %v1917 = vand.u32 2147483647, %v1916
        %vm1918 = vcmp.le.f32.partialorder %v1917, 0.7853982
        %vm1919 = vcmp.lt.s32.totalorder %v1916, 0
        %v1920 = vand.u32 %v1916, 2139095040
        %v1921 = vshrl.u32 %v1920, 23
        %v1922 = vsub.s32 %v1921, 127
        %v1923 = vand.u32 2147483647, %v1916
        %v1924 = vand.u32 %v1923, 8388607
        %v1925 = vor.u32 %v1924, 8388608
        %v1926 = vsub.s32 0, %v1925
        %v1927 = vadd.s32 %v1922, 1
        %vm1928 = vcmp.gt.s32.totalorder %v1927, 0
        %v1929 = vsel %vm1928, %v1927, 0
        %v1930 = vshrl.u32 %v1929, 5
        %v1931 = vand.u32 %v1929, 31
        %v1932 = vsub.s32 32, %v1931
        %v1933 = vshrl.u32 683565275, %v1932
        %v1934 = vshll.u32 683565275, %v1931
        %v1935 = vshrl.u32 2475754826, %v1932
        %v1936 = vor.u32 %v1934, %v1935
        %v1937 = vshll.u32 2475754826, %v1931
        %v1938 = vshrl.u32 2131351028, %v1932
        %v1939 = vor.u32 %v1937, %v1938
        %v1940 = vshll.u32 2131351028, %v1931
        %v1941 = vshrl.u32 2102212464, %v1932
        %v1942 = vor.u32 %v1940, %v1941
        %v1943 = vshll.u32 2102212464, %v1931
        %v1944 = vshrl.u32 920167782, %v1932
        %v1945 = vor.u32 %v1943, %v1944
        %v1946 = vshll.u32 920167782, %v1931
        %v1947 = vshrl.u32 1326507024, %v1932
        %v1948 = vor.u32 %v1946, %v1947
        %vm1949 = vcmp.lt.s32.totalorder %v1930, 1
        %vm1950 = vcmp.lt.s32.totalorder %v1930, 2
        %vm1951 = vcmp.lt.s32.totalorder %v1930, 3
        %vm1952 = vcmp.lt.s32.totalorder %v1930, 4
        %v1953 = vsel %vm1949, %v1933, %v1936
        %v1954 = vsel %vm1952, %v1942, 2102212464
        %v1955 = vsel %vm1951, %v1939, %v1954
        %v1956 = vsel %vm1950, %v1953, %v1955
        %v1957 = vsel %vm1949, %v1936, %v1939
        %v1958 = vsel %vm1952, %v1945, 920167782
        %v1959 = vsel %vm1951, %v1942, %v1958
        %v1960 = vsel %vm1950, %v1957, %v1959
        %v1961 = vsel %vm1949, %v1939, %v1942
        %v1962 = vsel %vm1952, %v1948, 1326507024
        %v1963 = vsel %vm1951, %v1945, %v1962
        %v1964 = vsel %vm1950, %v1961, %v1963
        %v1965 = vshll.u32 %v1925, 8
        %v1966 = vand.u32 %v1965, 65535
        %v1967 = vshrl.u32 %v1965, 16
        %v1968 = vand.u32 %v1964, 65535
        %v1969 = vshrl.u32 %v1964, 16
        %v1970 = vmul.u32 %v1966, %v1968
        %v1971 = vmul.u32 %v1966, %v1969
        %v1972 = vmul.u32 %v1967, %v1968
        %v1973 = vmul.u32 %v1967, %v1969
        %v1974 = vshll.u32 %v1971, 16
        %v1975 = vshrl.u32 %v1971, 16
        %v1976 = vshll.u32 %v1972, 16
        %v1977 = vshrl.u32 %v1972, 16
        %vm1978 = vc.u32 %v1970, %v1974
        %v1979 = vsel %vm1978, 1, 0
        %v1980 = vadd.s32 %v1970, %v1974
        %v1981 = vadd.s32 %v1973, %v1979
        %vm1982 = vc.u32 %v1980, %v1976
        %v1983 = vsel %vm1982, 1, 0
        %v1984 = vadd.s32 %v1980, %v1976
        %v1985 = vadd.s32 %v1981, %v1983
        %v1986 = vadd.s32 %v1985, %v1975
        %v1987 = vadd.s32 %v1986, %v1977
        %v1988 = vand.u32 %v1965, 65535
        %v1989 = vshrl.u32 %v1965, 16
        %v1990 = vand.u32 %v1960, 65535
        %v1991 = vshrl.u32 %v1960, 16
        %v1992 = vmul.u32 %v1988, %v1990
        %v1993 = vmul.u32 %v1988, %v1991
        %v1994 = vmul.u32 %v1989, %v1990
        %v1995 = vmul.u32 %v1989, %v1991
        %v1996 = vshll.u32 %v1993, 16
        %v1997 = vshrl.u32 %v1993, 16
        %v1998 = vshll.u32 %v1994, 16
        %v1999 = vshrl.u32 %v1994, 16
        %vm2000 = vc.u32 %v1992, %v1996
        %v2001 = vsel %vm2000, 1, 0
        %v2002 = vadd.s32 %v1992, %v1996
        %v2003 = vadd.s32 %v1995, %v2001
        %vm2004 = vc.u32 %v2002, %v1998
        %v2005 = vsel %vm2004, 1, 0
        %v2006 = vadd.s32 %v2002, %v1998
        %v2007 = vadd.s32 %v2003, %v2005
        %v2008 = vadd.s32 %v2007, %v1997
        %v2009 = vadd.s32 %v2008, %v1999
        %v2010 = vmul.u32 %v1965, %v1956
        %v2011 = vadd.s32 %v1987, %v2006
        %vm2012 = vc.u32 %v1987, %v2006
        %v2013 = vadd.s32 %v2009, 1
        %v2014 = vsel %vm2012, %v2013, %v2009
        %v2015 = vadd.s32 %v2010, %v2014
        %v2016 = vadd.s32 %v2015, 536870912
        %v2017 = vshrl.u32 %v2016, 30
        %v2018 = vshll.u32 %v2017, 30
        %v2019 = vsub.s32 %v2015, %v2018
        %vm2020 = vcmp.lt.s32.totalorder %v2019, 0
        %v2021 = vsub.s32 0, %v2019
        %v2022 = vsel %vm2020, %v2021, %v2019
        %v2023 = vclz %v2022
        %v2024 = vsub.s32 %v2023, 2
        %vm2025 = vcmp.gt.s32.totalorder 0, %v2024
        %v2026 = vsel %vm2025, 0, %v2024
        %v2027 = vsub.s32 32, %v2026
        %v2028 = vshll.u32 %v2019, %v2026
        %v2029 = vshrl.u32 %v2011, %v2027
        %v2030 = vor.u32 %v2028, %v2029
        %v2031 = vsub.s32 4294967266, %v2026
        %v2032 = vadd.s32 %v2031, 127
        %v2033 = vshll.u32 %v2032, 23
        %v2034 = vor.u32 4788187, %v2033
        %v2035 = vand.u32 2147483647, %v2034
        %v2037 = vcvt.s32.f32 %v2030
        %v2038 = vmul.f32 %v2037, %v2035
        %v2039 = vxor.u32 %v2038, 2147483648
        %v2040 = vsel %vm1919, %v2039, %v2038
        %v2041 = vsub.s32 4, %v2017
        %v2042 = vsel %vm1919, %v2041, %v2017
        %v2043 = vsel %vm1918, %v1916, %v2040
        %v2044 = vsel %vm1918, 0, %v2042
        %v2045 = vmul.f32 %v2043, %v2043
        %v2046 = vmul.f32 %v2045, -0.001358992
        %v2047 = vadd.f32 %v2046, 0.041655596
        %v2048 = vmul.f32 %v2045, %v2047
        %v2049 = vadd.f32 %v2048, -0.4999988
        %v2050 = vmul.f32 %v2045, %v2049
        %v2051 = vadd.f32 1.0, %v2050
        %v2052 = vmul.f32 %v2043, %v2043
        %v2053 = vmul.f32 %v2052, -0.00019511016
        %v2054 = vadd.f32 %v2053, 0.008332121
        %v2055 = vmul.f32 %v2052, %v2054
        %v2056 = vadd.f32 %v2055, -0.16666654
        %v2057 = vmul.f32 %v2052, %v2056
        %v2058 = vadd.f32 %v2057, 1.0
        %v2059 = vmul.f32 %v2058, %v2043
        %vm2060 = vweird.f32 %v1916
        %v2061 = vand.u32 %v2044, 3
        %vm2062 = vcmp.lt.s32.totalorder %v2061, 2
        %vm2063 = vcmp.eq.s32.totalorder %v2061, 0
        %v2064 = vxor.u32 %v2059, 2147483648
        %v2065 = vsel %vm2063, %v2051, %v2064
        %vm2066 = vcmp.eq.s32.totalorder %v2061, 2
        %v2067 = vxor.u32 %v2051, 2147483648
        %v2068 = vsel %vm2066, %v2067, %v2059
        %v2069 = vsel %vm2062, %v2065, %v2068
        %v2070 = vsel %vm2060, nan, %v2069
        %v2071 = vmul.f32 %v1915, %v2070
        %v2072 = vand.u32 2147483647, %v1916
        %vm2073 = vcmp.le.f32.partialorder %v2072, 0.7853982
        %vm2074 = vcmp.lt.s32.totalorder %v1916, 0
        %v2075 = vand.u32 %v1916, 2139095040
        %v2076 = vshrl.u32 %v2075, 23
        %v2077 = vsub.s32 %v2076, 127
        %v2078 = vand.u32 2147483647, %v1916
        %v2079 = vand.u32 %v2078, 8388607
        %v2080 = vor.u32 %v2079, 8388608
        %v2081 = vsub.s32 0, %v2080
        %v2082 = vadd.s32 %v2077, 1
        %vm2083 = vcmp.gt.s32.totalorder %v2082, 0
        %v2084 = vsel %vm2083, %v2082, 0
        %v2085 = vshrl.u32 %v2084, 5
        %v2086 = vand.u32 %v2084, 31
        %v2087 = vsub.s32 32, %v2086
        %v2088 = vshrl.u32 683565275, %v2087
        %v2089 = vshll.u32 683565275, %v2086
        %v2090 = vshrl.u32 2475754826, %v2087
        %v2091 = vor.u32 %v2089, %v2090
        %v2092 = vshll.u32 2475754826, %v2086
        %v2093 = vshrl.u32 2131351028, %v2087
        %v2094 = vor.u32 %v2092, %v2093
        %v2095 = vshll.u32 2131351028, %v2086
        %v2096 = vshrl.u32 2102212464, %v2087
        %v2097 = vor.u32 %v2095, %v2096
        %v2098 = vshll.u32 2102212464, %v2086
        %v2099 = vshrl.u32 920167782, %v2087
        %v2100 = vor.u32 %v2098, %v2099
        %v2101 = vshll.u32 920167782, %v2086
        %v2102 = vshrl.u32 1326507024, %v2087
        %v2103 = vor.u32 %v2101, %v2102
        %vm2104 = vcmp.lt.s32.totalorder %v2085, 1
        %vm2105 = vcmp.lt.s32.totalorder %v2085, 2
        %vm2106 = vcmp.lt.s32.totalorder %v2085, 3
        %vm2107 = vcmp.lt.s32.totalorder %v2085, 4
        %v2108 = vsel %vm2104, %v2088, %v2091
        %v2109 = vsel %vm2107, %v2097, 2102212464
        %v2110 = vsel %vm2106, %v2094, %v2109
        %v2111 = vsel %vm2105, %v2108, %v2110
        %v2112 = vsel %vm2104, %v2091, %v2094
        %v2113 = vsel %vm2107, %v2100, 920167782
        %v2114 = vsel %vm2106, %v2097, %v2113
        %v2115 = vsel %vm2105, %v2112, %v2114
        %v2116 = vsel %vm2104, %v2094, %v2097
        %v2117 = vsel %vm2107, %v2103, 1326507024
        %v2118 = vsel %vm2106, %v2100, %v2117
        %v2119 = vsel %vm2105, %v2116, %v2118
        %v2120 = vshll.u32 %v2080, 8
        %v2121 = vand.u32 %v2120, 65535
        %v2122 = vshrl.u32 %v2120, 16
        %v2123 = vand.u32 %v2119, 65535
        %v2124 = vshrl.u32 %v2119, 16
        %v2125 = vmul.u32 %v2121, %v2123
        %v2126 = vmul.u32 %v2121, %v2124
        %v2127 = vmul.u32 %v2122, %v2123
        %v2128 = vmul.u32 %v2122, %v2124
        %v2129 = vshll.u32 %v2126, 16
        %v2130 = vshrl.u32 %v2126, 16
        %v2131 = vshll.u32 %v2127, 16
        %v2132 = vshrl.u32 %v2127, 16
        %vm2133 = vc.u32 %v2125, %v2129
        %v2134 = vsel %vm2133, 1, 0
        %v2135 = vadd.s32 %v2125, %v2129
        %v2136 = vadd.s32 %v2128, %v2134
        %vm2137 = vc.u32 %v2135, %v2131
        %v2138 = vsel %vm2137, 1, 0
        %v2139 = vadd.s32 %v2135, %v2131
        %v2140 = vadd.s32 %v2136, %v2138
        %v2141 = vadd.s32 %v2140, %v2130
        %v2142 = vadd.s32 %v2141, %v2132
        %v2143 = vand.u32 %v2120, 65535
        %v2144 = vshrl.u32 %v2120, 16
        %v2145 = vand.u32 %v2115, 65535
        %v2146 = vshrl.u32 %v2115, 16
        %v2147 = vmul.u32 %v2143, %v2145
        %v2148 = vmul.u32 %v2143, %v2146
        %v2149 = vmul.u32 %v2144, %v2145
        %v2150 = vmul.u32 %v2144, %v2146
        %v2151 = vshll.u32 %v2148, 16
        %v2152 = vshrl.u32 %v2148, 16
        %v2153 = vshll.u32 %v2149, 16
        %v2154 = vshrl.u32 %v2149, 16
        %vm2155 = vc.u32 %v2147, %v2151
        %v2156 = vsel %vm2155, 1, 0
        %v2157 = vadd.s32 %v2147, %v2151
        %v2158 = vadd.s32 %v2150, %v2156
        %vm2159 = vc.u32 %v2157, %v2153
        %v2160 = vsel %vm2159, 1, 0
        %v2161 = vadd.s32 %v2157, %v2153
        %v2162 = vadd.s32 %v2158, %v2160
        %v2163 = vadd.s32 %v2162, %v2152
        %v2164 = vadd.s32 %v2163, %v2154
        %v2165 = vmul.u32 %v2120, %v2111
        %v2166 = vadd.s32 %v2142, %v2161
        %vm2167 = vc.u32 %v2142, %v2161
        %v2168 = vadd.s32 %v2164, 1
        %v2169 = vsel %vm2167, %v2168, %v2164
        %v2170 = vadd.s32 %v2165, %v2169
        %v2171 = vadd.s32 %v2170, 536870912
        %v2172 = vshrl.u32 %v2171, 30
        %v2173 = vshll.u32 %v2172, 30
        %v2174 = vsub.s32 %v2170, %v2173
        %vm2175 = vcmp.lt.s32.totalorder %v2174, 0
        %v2176 = vsub.s32 0, %v2174
        %v2177 = vsel %vm2175, %v2176, %v2174
        %v2178 = vclz %v2177
        %v2179 = vsub.s32 %v2178, 2
        %vm2180 = vcmp.gt.s32.totalorder 0, %v2179
        %v2181 = vsel %vm2180, 0, %v2179
        %v2182 = vsub.s32 32, %v2181
        %v2183 = vshll.u32 %v2174, %v2181
        %v2184 = vshrl.u32 %v2166, %v2182
        %v2185 = vor.u32 %v2183, %v2184
        %v2186 = vsub.s32 4294967266, %v2181
        %v2187 = vadd.s32 %v2186, 127
        %v2188 = vshll.u32 %v2187, 23
        %v2189 = vor.u32 4788187, %v2188
        %v2190 = vand.u32 2147483647, %v2189
        %v2192 = vcvt.s32.f32 %v2185
        %v2193 = vmul.f32 %v2192, %v2190
        %v2194 = vxor.u32 %v2193, 2147483648
        %v2195 = vsel %vm2074, %v2194, %v2193
        %v2196 = vsub.s32 4, %v2172
        %v2197 = vsel %vm2074, %v2196, %v2172
        %v2198 = vsel %vm2073, %v1916, %v2195
        %v2199 = vsel %vm2073, 0, %v2197
        %v2200 = vmul.f32 %v2198, %v2198
        %v2201 = vmul.f32 %v2200, -0.001358992
        %v2202 = vadd.f32 %v2201, 0.041655596
        %v2203 = vmul.f32 %v2200, %v2202
        %v2204 = vadd.f32 %v2203, -0.4999988
        %v2205 = vmul.f32 %v2200, %v2204
        %v2206 = vadd.f32 1.0, %v2205
        %v2207 = vmul.f32 %v2198, %v2198
        %v2208 = vmul.f32 %v2207, -0.00019511016
        %v2209 = vadd.f32 %v2208, 0.008332121
        %v2210 = vmul.f32 %v2207, %v2209
        %v2211 = vadd.f32 %v2210, -0.16666654
        %v2212 = vmul.f32 %v2207, %v2211
        %v2213 = vadd.f32 %v2212, 1.0
        %v2214 = vmul.f32 %v2213, %v2198
        %vm2215 = vweird.f32 %v1916
        %v2216 = vadd.s32 %v2199, 3
        %v2217 = vand.u32 %v2216, 3
        %vm2218 = vcmp.lt.s32.totalorder %v2217, 2
        %vm2219 = vcmp.eq.s32.totalorder %v2217, 0
        %v2220 = vxor.u32 %v2214, 2147483648
        %v2221 = vsel %vm2219, %v2206, %v2220
        %vm2222 = vcmp.eq.s32.totalorder %v2217, 2
        %v2223 = vxor.u32 %v2206, 2147483648
        %v2224 = vsel %vm2222, %v2223, %v2214
        %v2225 = vsel %vm2218, %v2221, %v2224
        %v2226 = vsel %vm2215, nan, %v2225
        %v2227 = vmul.f32 %v1915, %v2226
        %v2228 = vstv %s222
        %v2229 = vmul.f32 %v2228, %v223
        %v2230 = vstv %s217
        %v2231 = vadd.f32 %v2230, %v2229
        %v2232 = vand.u32 2147483647, %v2231
        %vm2233 = vcmp.le.f32.partialorder %v2232, 0.7853982
        %vm2234 = vcmp.lt.s32.totalorder %v2231, 0
        %v2235 = vand.u32 %v2231, 2139095040
        %v2236 = vshrl.u32 %v2235, 23
        %v2237 = vsub.s32 %v2236, 127
        %v2238 = vand.u32 2147483647, %v2231
        %v2239 = vand.u32 %v2238, 8388607
        %v2240 = vor.u32 %v2239, 8388608
        %v2241 = vsub.s32 0, %v2240
        %v2242 = vadd.s32 %v2237, 1
        %vm2243 = vcmp.gt.s32.totalorder %v2242, 0
        %v2244 = vsel %vm2243, %v2242, 0
        %v2245 = vshrl.u32 %v2244, 5
        %v2246 = vand.u32 %v2244, 31
        %v2247 = vsub.s32 32, %v2246
        %v2248 = vshrl.u32 683565275, %v2247
        %v2249 = vshll.u32 683565275, %v2246
        %v2250 = vshrl.u32 2475754826, %v2247
        %v2251 = vor.u32 %v2249, %v2250
        %v2252 = vshll.u32 2475754826, %v2246
        %v2253 = vshrl.u32 2131351028, %v2247
        %v2254 = vor.u32 %v2252, %v2253
        %v2255 = vshll.u32 2131351028, %v2246
        %v2256 = vshrl.u32 2102212464, %v2247
        %v2257 = vor.u32 %v2255, %v2256
        %v2258 = vshll.u32 2102212464, %v2246
        %v2259 = vshrl.u32 920167782, %v2247
        %v2260 = vor.u32 %v2258, %v2259
        %v2261 = vshll.u32 920167782, %v2246
        %v2262 = vshrl.u32 1326507024, %v2247
        %v2263 = vor.u32 %v2261, %v2262
        %vm2264 = vcmp.lt.s32.totalorder %v2245, 1
        %vm2265 = vcmp.lt.s32.totalorder %v2245, 2
        %vm2266 = vcmp.lt.s32.totalorder %v2245, 3
        %vm2267 = vcmp.lt.s32.totalorder %v2245, 4
        %v2268 = vsel %vm2264, %v2248, %v2251
        %v2269 = vsel %vm2267, %v2257, 2102212464
        %v2270 = vsel %vm2266, %v2254, %v2269
        %v2271 = vsel %vm2265, %v2268, %v2270
        %v2272 = vsel %vm2264, %v2251, %v2254
        %v2273 = vsel %vm2267, %v2260, 920167782
        %v2274 = vsel %vm2266, %v2257, %v2273
        %v2275 = vsel %vm2265, %v2272, %v2274
        %v2276 = vsel %vm2264, %v2254, %v2257
        %v2277 = vsel %vm2267, %v2263, 1326507024
        %v2278 = vsel %vm2266, %v2260, %v2277
        %v2279 = vsel %vm2265, %v2276, %v2278
        %v2280 = vshll.u32 %v2240, 8
        %v2281 = vand.u32 %v2280, 65535
        %v2282 = vshrl.u32 %v2280, 16
        %v2283 = vand.u32 %v2279, 65535
        %v2284 = vshrl.u32 %v2279, 16
        %v2285 = vmul.u32 %v2281, %v2283
        %v2286 = vmul.u32 %v2281, %v2284
        %v2287 = vmul.u32 %v2282, %v2283
        %v2288 = vmul.u32 %v2282, %v2284
        %v2289 = vshll.u32 %v2286, 16
        %v2290 = vshrl.u32 %v2286, 16
        %v2291 = vshll.u32 %v2287, 16
        %v2292 = vshrl.u32 %v2287, 16
        %vm2293 = vc.u32 %v2285, %v2289
        %v2294 = vsel %vm2293, 1, 0
        %v2295 = vadd.s32 %v2285, %v2289
        %v2296 = vadd.s32 %v2288, %v2294
        %vm2297 = vc.u32 %v2295, %v2291
        %v2298 = vsel %vm2297, 1, 0
        %v2299 = vadd.s32 %v2295, %v2291
        %v2300 = vadd.s32 %v2296, %v2298
        %v2301 = vadd.s32 %v2300, %v2290
        %v2302 = vadd.s32 %v2301, %v2292
        %v2303 = vand.u32 %v2280, 65535
        %v2304 = vshrl.u32 %v2280, 16
        %v2305 = vand.u32 %v2275, 65535
        %v2306 = vshrl.u32 %v2275, 16
        %v2307 = vmul.u32 %v2303, %v2305
        %v2308 = vmul.u32 %v2303, %v2306
        %v2309 = vmul.u32 %v2304, %v2305
        %v2310 = vmul.u32 %v2304, %v2306
        %v2311 = vshll.u32 %v2308, 16
        %v2312 = vshrl.u32 %v2308, 16
        %v2313 = vshll.u32 %v2309, 16
        %v2314 = vshrl.u32 %v2309, 16
        %vm2315 = vc.u32 %v2307, %v2311
        %v2316 = vsel %vm2315, 1, 0
        %v2317 = vadd.s32 %v2307, %v2311
        %v2318 = vadd.s32 %v2310, %v2316
        %vm2319 = vc.u32 %v2317, %v2313
        %v2320 = vsel %vm2319, 1, 0
        %v2321 = vadd.s32 %v2317, %v2313
        %v2322 = vadd.s32 %v2318, %v2320
        %v2323 = vadd.s32 %v2322, %v2312
        %v2324 = vadd.s32 %v2323, %v2314
        %v2325 = vmul.u32 %v2280, %v2271
        %v2326 = vadd.s32 %v2302, %v2321
        %vm2327 = vc.u32 %v2302, %v2321
        %v2328 = vadd.s32 %v2324, 1
        %v2329 = vsel %vm2327, %v2328, %v2324
        %v2330 = vadd.s32 %v2325, %v2329
        %v2331 = vadd.s32 %v2330, 536870912
        %v2332 = vshrl.u32 %v2331, 30
        %v2333 = vshll.u32 %v2332, 30
        %v2334 = vsub.s32 %v2330, %v2333
        %vm2335 = vcmp.lt.s32.totalorder %v2334, 0
        %v2336 = vsub.s32 0, %v2334
        %v2337 = vsel %vm2335, %v2336, %v2334
        %v2338 = vclz %v2337
        %v2339 = vsub.s32 %v2338, 2
        %vm2340 = vcmp.gt.s32.totalorder 0, %v2339
        %v2341 = vsel %vm2340, 0, %v2339
        %v2342 = vsub.s32 32, %v2341
        %v2343 = vshll.u32 %v2334, %v2341
        %v2344 = vshrl.u32 %v2326, %v2342
        %v2345 = vor.u32 %v2343, %v2344
        %v2346 = vsub.s32 4294967266, %v2341
        %v2347 = vadd.s32 %v2346, 127
        %v2348 = vshll.u32 %v2347, 23
        %v2349 = vor.u32 4788187, %v2348
        %v2350 = vand.u32 2147483647, %v2349
        %v2352 = vcvt.s32.f32 %v2345
        %v2353 = vmul.f32 %v2352, %v2350
        %v2354 = vxor.u32 %v2353, 2147483648
        %v2355 = vsel %vm2234, %v2354, %v2353
        %v2356 = vsub.s32 4, %v2332
        %v2357 = vsel %vm2234, %v2356, %v2332
        %v2358 = vsel %vm2233, %v2231, %v2355
        %v2359 = vsel %vm2233, 0, %v2357
        %v2360 = vmul.f32 %v2358, %v2358
        %v2361 = vmul.f32 %v2360, -0.001358992
        %v2362 = vadd.f32 %v2361, 0.041655596
        %v2363 = vmul.f32 %v2360, %v2362
        %v2364 = vadd.f32 %v2363, -0.4999988
        %v2365 = vmul.f32 %v2360, %v2364
        %v2366 = vadd.f32 1.0, %v2365
        %v2367 = vmul.f32 %v2358, %v2358
        %v2368 = vmul.f32 %v2367, -0.00019511016
        %v2369 = vadd.f32 %v2368, 0.008332121
        %v2370 = vmul.f32 %v2367, %v2369
        %v2371 = vadd.f32 %v2370, -0.16666654
        %v2372 = vmul.f32 %v2367, %v2371
        %v2373 = vadd.f32 %v2372, 1.0
        %v2374 = vmul.f32 %v2373, %v2358
        %vm2375 = vweird.f32 %v2231
        %v2376 = vand.u32 %v2359, 3
        %vm2377 = vcmp.lt.s32.totalorder %v2376, 2
        %vm2378 = vcmp.eq.s32.totalorder %v2376, 0
        %v2379 = vxor.u32 %v2374, 2147483648
        %v2380 = vsel %vm2378, %v2366, %v2379
        %vm2381 = vcmp.eq.s32.totalorder %v2376, 2
        %v2382 = vxor.u32 %v2366, 2147483648
        %v2383 = vsel %vm2381, %v2382, %v2374
        %v2384 = vsel %vm2377, %v2380, %v2383
        %v2385 = vsel %vm2375, nan, %v2384
        %v2386 = vmul.f32 %v2227, %v2385
        %v2387 = vand.u32 2147483647, %v2231
        %vm2388 = vcmp.le.f32.partialorder %v2387, 0.7853982
        %vm2389 = vcmp.lt.s32.totalorder %v2231, 0
        %v2390 = vand.u32 %v2231, 2139095040
        %v2391 = vshrl.u32 %v2390, 23
        %v2392 = vsub.s32 %v2391, 127
        %v2393 = vand.u32 2147483647, %v2231
        %v2394 = vand.u32 %v2393, 8388607
        %v2395 = vor.u32 %v2394, 8388608
        %v2396 = vsub.s32 0, %v2395
        %v2397 = vadd.s32 %v2392, 1
        %vm2398 = vcmp.gt.s32.totalorder %v2397, 0
        %v2399 = vsel %vm2398, %v2397, 0
        %v2400 = vshrl.u32 %v2399, 5
        %v2401 = vand.u32 %v2399, 31
        %v2402 = vsub.s32 32, %v2401
        %v2403 = vshrl.u32 683565275, %v2402
        %v2404 = vshll.u32 683565275, %v2401
        %v2405 = vshrl.u32 2475754826, %v2402
        %v2406 = vor.u32 %v2404, %v2405
        %v2407 = vshll.u32 2475754826, %v2401
        %v2408 = vshrl.u32 2131351028, %v2402
        %v2409 = vor.u32 %v2407, %v2408
        %v2410 = vshll.u32 2131351028, %v2401
        %v2411 = vshrl.u32 2102212464, %v2402
        %v2412 = vor.u32 %v2410, %v2411
        %v2413 = vshll.u32 2102212464, %v2401
        %v2414 = vshrl.u32 920167782, %v2402
        %v2415 = vor.u32 %v2413, %v2414
        %v2416 = vshll.u32 920167782, %v2401
        %v2417 = vshrl.u32 1326507024, %v2402
        %v2418 = vor.u32 %v2416, %v2417
        %vm2419 = vcmp.lt.s32.totalorder %v2400, 1
        %vm2420 = vcmp.lt.s32.totalorder %v2400, 2
        %vm2421 = vcmp.lt.s32.totalorder %v2400, 3
        %vm2422 = vcmp.lt.s32.totalorder %v2400, 4
        %v2423 = vsel %vm2419, %v2403, %v2406
        %v2424 = vsel %vm2422, %v2412, 2102212464
        %v2425 = vsel %vm2421, %v2409, %v2424
        %v2426 = vsel %vm2420, %v2423, %v2425
        %v2427 = vsel %vm2419, %v2406, %v2409
        %v2428 = vsel %vm2422, %v2415, 920167782
        %v2429 = vsel %vm2421, %v2412, %v2428
        %v2430 = vsel %vm2420, %v2427, %v2429
        %v2431 = vsel %vm2419, %v2409, %v2412
        %v2432 = vsel %vm2422, %v2418, 1326507024
        %v2433 = vsel %vm2421, %v2415, %v2432
        %v2434 = vsel %vm2420, %v2431, %v2433
        %v2435 = vshll.u32 %v2395, 8
        %v2436 = vand.u32 %v2435, 65535
        %v2437 = vshrl.u32 %v2435, 16
        %v2438 = vand.u32 %v2434, 65535
        %v2439 = vshrl.u32 %v2434, 16
        %v2440 = vmul.u32 %v2436, %v2438
        %v2441 = vmul.u32 %v2436, %v2439
        %v2442 = vmul.u32 %v2437, %v2438
        %v2443 = vmul.u32 %v2437, %v2439
        %v2444 = vshll.u32 %v2441, 16
        %v2445 = vshrl.u32 %v2441, 16
        %v2446 = vshll.u32 %v2442, 16
        %v2447 = vshrl.u32 %v2442, 16
        %vm2448 = vc.u32 %v2440, %v2444
        %v2449 = vsel %vm2448, 1, 0
        %v2450 = vadd.s32 %v2440, %v2444
        %v2451 = vadd.s32 %v2443, %v2449
        %vm2452 = vc.u32 %v2450, %v2446
        %v2453 = vsel %vm2452, 1, 0
        %v2454 = vadd.s32 %v2450, %v2446
        %v2455 = vadd.s32 %v2451, %v2453
        %v2456 = vadd.s32 %v2455, %v2445
        %v2457 = vadd.s32 %v2456, %v2447
        %v2458 = vand.u32 %v2435, 65535
        %v2459 = vshrl.u32 %v2435, 16
        %v2460 = vand.u32 %v2430, 65535
        %v2461 = vshrl.u32 %v2430, 16
        %v2462 = vmul.u32 %v2458, %v2460
        %v2463 = vmul.u32 %v2458, %v2461
        %v2464 = vmul.u32 %v2459, %v2460
        %v2465 = vmul.u32 %v2459, %v2461
        %v2466 = vshll.u32 %v2463, 16
        %v2467 = vshrl.u32 %v2463, 16
        %v2468 = vshll.u32 %v2464, 16
        %v2469 = vshrl.u32 %v2464, 16
        %vm2470 = vc.u32 %v2462, %v2466
        %v2471 = vsel %vm2470, 1, 0
        %v2472 = vadd.s32 %v2462, %v2466
        %v2473 = vadd.s32 %v2465, %v2471
        %vm2474 = vc.u32 %v2472, %v2468
        %v2475 = vsel %vm2474, 1, 0
        %v2476 = vadd.s32 %v2472, %v2468
        %v2477 = vadd.s32 %v2473, %v2475
        %v2478 = vadd.s32 %v2477, %v2467
        %v2479 = vadd.s32 %v2478, %v2469
        %v2480 = vmul.u32 %v2435, %v2426
        %v2481 = vadd.s32 %v2457, %v2476
        %vm2482 = vc.u32 %v2457, %v2476
        %v2483 = vadd.s32 %v2479, 1
        %v2484 = vsel %vm2482, %v2483, %v2479
        %v2485 = vadd.s32 %v2480, %v2484
        %v2486 = vadd.s32 %v2485, 536870912
        %v2487 = vshrl.u32 %v2486, 30
        %v2488 = vshll.u32 %v2487, 30
        %v2489 = vsub.s32 %v2485, %v2488
        %vm2490 = vcmp.lt.s32.totalorder %v2489, 0
        %v2491 = vsub.s32 0, %v2489
        %v2492 = vsel %vm2490, %v2491, %v2489
        %v2493 = vclz %v2492
        %v2494 = vsub.s32 %v2493, 2
        %vm2495 = vcmp.gt.s32.totalorder 0, %v2494
        %v2496 = vsel %vm2495, 0, %v2494
        %v2497 = vsub.s32 32, %v2496
        %v2498 = vshll.u32 %v2489, %v2496
        %v2499 = vshrl.u32 %v2481, %v2497
        %v2500 = vor.u32 %v2498, %v2499
        %v2501 = vsub.s32 4294967266, %v2496
        %v2502 = vadd.s32 %v2501, 127
        %v2503 = vshll.u32 %v2502, 23
        %v2504 = vor.u32 4788187, %v2503
        %v2505 = vand.u32 2147483647, %v2504
        %v2507 = vcvt.s32.f32 %v2500
        %v2508 = vmul.f32 %v2507, %v2505
        %v2509 = vxor.u32 %v2508, 2147483648
        %v2510 = vsel %vm2389, %v2509, %v2508
        %v2511 = vsub.s32 4, %v2487
        %v2512 = vsel %vm2389, %v2511, %v2487
        %v2513 = vsel %vm2388, %v2231, %v2510
        %v2514 = vsel %vm2388, 0, %v2512
        %v2515 = vmul.f32 %v2513, %v2513
        %v2516 = vmul.f32 %v2515, -0.001358992
        %v2517 = vadd.f32 %v2516, 0.041655596
        %v2518 = vmul.f32 %v2515, %v2517
        %v2519 = vadd.f32 %v2518, -0.4999988
        %v2520 = vmul.f32 %v2515, %v2519
        %v2521 = vadd.f32 1.0, %v2520
        %v2522 = vmul.f32 %v2513, %v2513
        %v2523 = vmul.f32 %v2522, -0.00019511016
        %v2524 = vadd.f32 %v2523, 0.008332121
        %v2525 = vmul.f32 %v2522, %v2524
        %v2526 = vadd.f32 %v2525, -0.16666654
        %v2527 = vmul.f32 %v2522, %v2526
        %v2528 = vadd.f32 %v2527, 1.0
        %v2529 = vmul.f32 %v2528, %v2513
        %vm2530 = vweird.f32 %v2231
        %v2531 = vadd.s32 %v2514, 3
        %v2532 = vand.u32 %v2531, 3
        %vm2533 = vcmp.lt.s32.totalorder %v2532, 2
        %vm2534 = vcmp.eq.s32.totalorder %v2532, 0
        %v2535 = vxor.u32 %v2529, 2147483648
        %v2536 = vsel %vm2534, %v2521, %v2535
        %vm2537 = vcmp.eq.s32.totalorder %v2532, 2
        %v2538 = vxor.u32 %v2521, 2147483648
        %v2539 = vsel %vm2537, %v2538, %v2529
        %v2540 = vsel %vm2533, %v2536, %v2539
        %v2541 = vsel %vm2530, nan, %v2540
        %v2542 = vmul.f32 %v2227, %v2541
        %v2543 = vand.u32 2147483647, %v2071
        %v2544 = vand.u32 2147483647, %v2386
        %v2545 = vmin.f32 %v2543, %v2544
        %v2546 = vmax.f32 %v2543, %v2544
        %v2547 = vrcp.pop %v2546
        %v2548 = vmul.f32 %v2546, %v2547
        %v2549 = vsub.f32 1.0, %v2548
        %v2550 = vmul.f32 %v2547, %v2549
        %v2551 = vadd.f32 %v2547, %v2550
        %vm2552 = vweird.f32 %v2546
        %vm2553 = vweird.f32 %v2547
        %vm2554 = vmor %vm2552, %vm2553
        %v2555 = vsel %vm2554, %v2547, %v2551
        %v2556 = vand.u32 2147483647, %v2546
        %vm2557 = vcmp.eq.f32.partialorder %v2556, 8.507059e+37
        %v2558 = vand.u32 %v2546, 2147483648
        %v2559 = vor.u32 1.1754944e-38, %v2558
        %v2560 = vsel %vm2557, %v2559, %v2555
        %v2561 = vmul.f32 %v2545, %v2560
        %v2562 = vmul.f32 %v2561, %v2561
        %v2563 = vmul.f32 0.002785687, %v2562
        %v2564 = vadd.f32 %v2563, -0.015866
        %v2565 = vmul.f32 %v2564, %v2562
        %v2566 = vadd.f32 %v2565, 0.04247222
        %v2567 = vmul.f32 %v2566, %v2562
        %v2568 = vadd.f32 %v2567, -0.074975304
        %v2569 = vmul.f32 %v2568, %v2562
        %v2570 = vadd.f32 %v2569, 0.1064488
        %v2571 = vmul.f32 %v2570, %v2562
        %v2572 = vadd.f32 %v2571, -0.14207031
        %v2573 = vmul.f32 %v2572, %v2562
        %v2574 = vadd.f32 %v2573, 0.19993454
        %v2575 = vmul.f32 %v2574, %v2562
        %v2576 = vadd.f32 %v2575, -0.33333147
        %v2577 = vmul.f32 %v2576, %v2562
        %v2578 = vmul.f32 %v2577, %v2561
        %v2579 = vadd.f32 %v2578, %v2561
        %vm2580 = vcmp.gt.f32.partialorder %v2544, %v2543
        %v2581 = vsub.f32 1.5707964, %v2579
        %v2582 = vsel %vm2580, %v2581, %v2579
        %vm2583 = vcmp.lt.f32.partialorder %v2071, 0.0
        %v2584 = vsub.f32 3.1415927, %v2582
        %v2585 = vsel %vm2583, %v2584, %v2582
        %vm2586 = vcmp.lt.s32.totalorder %v2071, 0
        %v2587 = vsel %vm2586, 3.1415927, 0.0
        %vm2588 = vcmp.eq.f32.partialorder %v2386, 0.0
        %v2589 = vsel %vm2588, %v2587, %v2585
        %vm2590 = vcmp.ne.f32.partialorder %v2071, %v2071
        %vm2591 = vcmp.ne.f32.partialorder %v2386, %v2386
        %vm2592 = vmor %vm2590, %vm2591
        %v2593 = vsel %vm2592, nan, %v2589
        %vm2594 = vcmp.lt.f32.partialorder %v2071, 0.0
        %v2595 = vsel %vm2594, 2.3561945, 0.7853982
        %vm2596 = vcmp.eq.s32.totalorder %v2543, inf
        %vm2597 = vcmp.eq.s32.totalorder %v2544, inf
        %vm2598 = vmand %vm2596, %vm2597
        %v2599 = vsel %vm2598, %v2595, %v2593
        %v2600 = vand.u32 2147483647, %v2599
        %v2601 = vand.u32 %v2386, 2147483648
        %v2602 = vor.u32 %v2600, %v2601
        %vm2603 = vcmp.lt.f32.partialorder %v2602, 0.0
        %v2604 = vadd.f32 %v2602, 6.2831855
        %v2605 = vsel %vm2603, %v2604, %v2602
        %v2606 = vmul.f32 %v2071, %v2071
        %v2607 = vmul.f32 %v2386, %v2386
        %v2608 = vadd.f32 %v2606, %v2607
        %v2609 = vrsqrt.pop %v2608
        %v2610 = vmul.f32 %v2609, %v2608
        %v2611 = vmul.f32 %v2610, %v2609
        %v2612 = vmul.f32 0.5, %v2611
        %v2613 = vsub.f32 1.5, %v2612
        %v2614 = vmul.f32 %v2609, %v2613
        %v2615 = vmul.f32 %v2608, %v2614
        %vm2616 = vcmp.eq.f32.partialorder %v2608, inf
        %v2617 = vsel %vm2616, %v2608, %v2615
        %vm2618 = vcmp.eq.f32.partialorder %v2608, 0.0
        %v2619 = vand.u32 %v2608, 2147483648
        %v2620 = vsel %vm2618, %v2619, %v2617
        %v2621 = vand.u32 2147483647, %v2620
        %v2622 = vand.u32 2147483647, %v2542
        %v2623 = vmin.f32 %v2621, %v2622
        %v2624 = vmax.f32 %v2621, %v2622
        %v2625 = vrcp.pop %v2624
        %v2626 = vmul.f32 %v2624, %v2625
        %v2627 = vsub.f32 1.0, %v2626
        %v2628 = vmul.f32 %v2625, %v2627
        %v2629 = vadd.f32 %v2625, %v2628
        %vm2630 = vweird.f32 %v2624
        %vm2631 = vweird.f32 %v2625
        %vm2632 = vmor %vm2630, %vm2631
        %v2633 = vsel %vm2632, %v2625, %v2629
        %v2634 = vand.u32 2147483647, %v2624
        %vm2635 = vcmp.eq.f32.partialorder %v2634, 8.507059e+37
        %v2636 = vand.u32 %v2624, 2147483648
        %v2637 = vor.u32 1.1754944e-38, %v2636
        %v2638 = vsel %vm2635, %v2637, %v2633
        %v2639 = vmul.f32 %v2623, %v2638
        %v2640 = vmul.f32 %v2639, %v2639
        %v2641 = vmul.f32 0.002785687, %v2640
        %v2642 = vadd.f32 %v2641, -0.015866
        %v2643 = vmul.f32 %v2642, %v2640
        %v2644 = vadd.f32 %v2643, 0.04247222
        %v2645 = vmul.f32 %v2644, %v2640
        %v2646 = vadd.f32 %v2645, -0.074975304
        %v2647 = vmul.f32 %v2646, %v2640
        %v2648 = vadd.f32 %v2647, 0.1064488
        %v2649 = vmul.f32 %v2648, %v2640
        %v2650 = vadd.f32 %v2649, -0.14207031
        %v2651 = vmul.f32 %v2650, %v2640
        %v2652 = vadd.f32 %v2651, 0.19993454
        %v2653 = vmul.f32 %v2652, %v2640
        %v2654 = vadd.f32 %v2653, -0.33333147
        %v2655 = vmul.f32 %v2654, %v2640
        %v2656 = vmul.f32 %v2655, %v2639
        %v2657 = vadd.f32 %v2656, %v2639
        %vm2658 = vcmp.gt.f32.partialorder %v2622, %v2621
        %v2659 = vsub.f32 1.5707964, %v2657
        %v2660 = vsel %vm2658, %v2659, %v2657
        %vm2661 = vcmp.lt.f32.partialorder %v2620, 0.0
        %v2662 = vsub.f32 3.1415927, %v2660
        %v2663 = vsel %vm2661, %v2662, %v2660
        %vm2664 = vcmp.lt.s32.totalorder %v2620, 0
        %v2665 = vsel %vm2664, 3.1415927, 0.0
        %vm2666 = vcmp.eq.f32.partialorder %v2542, 0.0
        %v2667 = vsel %vm2666, %v2665, %v2663
        %vm2668 = vcmp.ne.f32.partialorder %v2620, %v2620
        %vm2669 = vcmp.ne.f32.partialorder %v2542, %v2542
        %vm2670 = vmor %vm2668, %vm2669
        %v2671 = vsel %vm2670, nan, %v2667
        %vm2672 = vcmp.lt.f32.partialorder %v2620, 0.0
        %v2673 = vsel %vm2672, 2.3561945, 0.7853982
        %vm2674 = vcmp.eq.s32.totalorder %v2621, inf
        %vm2675 = vcmp.eq.s32.totalorder %v2622, inf
        %vm2676 = vmand %vm2674, %vm2675
        %v2677 = vsel %vm2676, %v2673, %v2671
        %v2678 = vand.u32 2147483647, %v2677
        %v2679 = vand.u32 %v2542, 2147483648
        %v2680 = vor.u32 %v2678, %v2679
        %vm2681 = vcmp.lt.f32.partialorder %v2680, 0.0
        %v2682 = vadd.f32 %v2680, 6.2831855
        %v2683 = vsel %vm2681, %v2682, %v2680
        %2684 = vst [vmem:[%s205] sm:$0xff] %v2605
        %2685 = vst [vmem:[%s212] sm:$0xff] %v2683
        %s2686 = sand.u32 %s80, 1
        %s2687 = scalar_lea.sflag [#allocation4], %s2686
        %s2688 = sand.u32 %s80, 1
        %s2689 = smul.addr %s2688, 8
        %s2690 = scalar_lea.vmem [#allocation7], %s2689
        %s2691 = sand.u32 %s106, 1
        %s2692 = scalar_lea.sflag [#allocation9], %s2691
        %s2693 = sand.u32 %s106, 1
        %s2694 = smul.addr %s2693, 8
        %s2695 = scalar_lea.vmem [#allocation8], %s2694
        // Predicated region
        $region37: #{tpu_custom_call.1} parent=27 // pred_check
          %p2696 = pneg %p90
        $region38: #{tpu_custom_call.1} parent=27 // pred_check_branch
          %2698 = sbr.rel (%p2696) target = $region40
        $region39: #{tpu_custom_call.1} parent=27 // pred_region
          %2700 = vsyncadd %s2687, 0
          %s2701 = smul.addr %s25, 8
          %s2702 = scalar_lea.hbm %s2, %s2701
          %s2704 = sshll.u32 %s2690, 4
          %s2705 = int_to_ptr.vmem [resolvable:$true] %s2704
          %s2706 = sshll.u32 %s2702, 4
          %s2707 = int_to_ptr.hbm [resolvable:$true] %s2706
          %2709 = dma.vmem_to_hbm [thread:$0]  %s2705, 128, %s2707, %s2687
        $region40: #{tpu_custom_call.1} parent=27 // pred_fallthru
          _
        // Predicated region
        $region41: #{tpu_custom_call.1} parent=27 // pred_check
          %p2710 = pneg %p116
        $region42: #{tpu_custom_call.1} parent=27 // pred_check_branch
          %2712 = sbr.rel (%p2710) target = $region44
        $region43: #{tpu_custom_call.1} parent=27 // pred_region
          %2714 = vsyncadd %s2692, 0
          %s2715 = smul.addr %s25, 8
          %s2716 = scalar_lea.hbm %s3, %s2715
          %s2718 = sshll.u32 %s2695, 4
          %s2719 = int_to_ptr.vmem [resolvable:$true] %s2718
          %s2720 = sshll.u32 %s2716, 4
          %s2721 = int_to_ptr.hbm [resolvable:$true] %s2720
          %2723 = dma.vmem_to_hbm [thread:$0]  %s2719, 128, %s2721, %s2692
        $region44: #{tpu_custom_call.1} parent=27 // pred_fallthru
          _
      $region28: #{tpu_custom_call.1} parent=5 // pred_fallthru
        _
      %p2724 = scmp.le.s32.totalorder 2, %s20
      // Predicated region
      $region45: #{tpu_custom_call.1} parent=5 // pred_check
        %p2725 = pneg %p2724
      $region46: #{tpu_custom_call.1} parent=5 // pred_check_branch
        %2727 = sbr.rel (%p2725) target = $region48
      $region47: #{tpu_custom_call.1} parent=5 // pred_region
        %s2728 = ssub.s32 %s20, 2
        // Predicated region
        $region49: #{tpu_custom_call.1} parent=47 // pred_check
          %p2729 = pneg %p96
        $region50: #{tpu_custom_call.1} parent=47 // pred_check_branch
          %2731 = sbr.rel (%p2729) target = $region52
        $region51: #{tpu_custom_call.1} parent=47 // pred_region
          %s2732 = sand.u32 %s81, 1
          %s2733 = scalar_lea.sflag [#allocation4], %s2732
          %s2734 = sand.u32 %s81, 1
          %s2735 = smul.addr %s2734, 8
          %s2736 = scalar_lea.vmem [#allocation7], %s2735
          %2738 = dma.done %s2733, 128
        $region52: #{tpu_custom_call.1} parent=47 // pred_fallthru
          _
        // Predicated region
        $region53: #{tpu_custom_call.1} parent=47 // pred_check
          %p2739 = pneg %p122
        $region54: #{tpu_custom_call.1} parent=47 // pred_check_branch
          %2741 = sbr.rel (%p2739) target = $region56
        $region55: #{tpu_custom_call.1} parent=47 // pred_region
          %s2742 = sand.u32 %s107, 1
          %s2743 = scalar_lea.sflag [#allocation9], %s2742
          %s2744 = sand.u32 %s107, 1
          %s2745 = smul.addr %s2744, 8
          %s2746 = scalar_lea.vmem [#allocation8], %s2745
          %2748 = dma.done %s2743, 128
        $region56: #{tpu_custom_call.1} parent=47 // pred_fallthru
          _
      $region48: #{tpu_custom_call.1} parent=5 // pred_fallthru
        _
    $region6: #{tpu_custom_call.1} parent=1 // loop_footer
      %s24 = sadd.s32 1, %s20
    $region7: #{tpu_custom_call.1} parent=1 // loop_footer_branch
      %19 = sbr.rel target = $region3
    $region8: #{tpu_custom_call.1} parent=1 // loop_exit
      _
    %2749 = vsyncpa [#allocation3], 1
    %s2750 = scalar_lea.sflag [#allocation3], 1
    %2751 = vsyncpa %s2750, 1
    %2752 = vsyncpa [#allocation4], 1
    %s2753 = scalar_lea.sflag [#allocation4], 1
    %2754 = vsyncpa %s2753, 1
    %2755 = vsyncpa [#allocation9], 1
    %s2756 = scalar_lea.sflag [#allocation9], 1
    %2757 = vsyncpa %s2756, 1
    %2758 = vsyncpa [#allocation5], 1
    %s2759 = scalar_lea.sflag [#allocation5], 1
    %2760 = vsyncpa %s2759, 1

</llo_original>
